<compile_context>
chip_gen: v5e
topology: v5e:2x2
jax: 0.10.0
libtpu: 0.0.40
codegen_flags: <defaults>
</compile_context>

<pallas_src>
import functools

import jax
import jax.numpy as jnp
from jax import lax
from jax.experimental import pallas as pl
from jax.experimental.pallas import tpu as pltpu


def encoder_kernel(ids_ref, emb_ref, wih_a_ref, wih_b_ref, bih_ref, whh_ref,
                   bhhn_ref, wfc_ref, bfc_ref, out_ref, hid_ref,
                   *, seq_len, batch_pad, hidden_pad, vocab):
    """Fused embedding-gather + bidirectional GRU + final Linear+tanh.

    ids_ref:   (S*Bp, 1)    int32 token ids, row t*Bp+b (padded batch rows = pad_idx)
    emb_ref:   (V, Hp)      bf16 embedding table (cols >= H zero)
    wih_a_ref: (Hp, 6Hp)    bf16 forward  input->gate weights (forward gate columns)
    wih_b_ref: (Hp, 6Hp)    bf16 backward input->gate weights (backward gate columns)
    bih_ref:   (1, 6Hp)     f32  b_ih (+ b_hh folded in for r,z gates)
    whh_ref:   (2Hp, 6Hp)   bf16 block-diagonal hidden->gate weights
    bhhn_ref:  (1, 2Hp)     f32  n-gate recurrent bias [b_hhn_f | b_hhn_b]
    wfc_ref:   (2Hp, Hp)    bf16 fc weights, bfc_ref: (1, Hp) f32
    out_ref:   (S*Bp, 2Hp)  f32  outputs: [:, :Hp] forward dir, [:, Hp:] backward dir
    hid_ref:   (Bp, Hp)     f32

    Gate column layout (each block Hp=hidden_pad lanes wide, 2Hp = 128):
        [ r_f | r_b | z_f | z_b | n_f | n_b ]
    """
    S, B, HP = seq_len, batch_pad, hidden_pad
    H2P = 2 * HP          # 128: one full lane group per gate pair

    # ---- In-kernel embedding gather: one-hot (MXU) instead of an XLA gather +
    #      HBM round trip of `embedded`. ----
    ids = ids_ref[...]                                              # (S*B, 1) i32
    viota = lax.broadcasted_iota(jnp.int32, (S * B, vocab), 1)
    onehot = jnp.where(jnp.broadcast_to(ids, (S * B, vocab)) == viota,
                       1.0, 0.0).astype(jnp.bfloat16)               # (S*B, V)
    x = jnp.dot(onehot, emb_ref[...],
                preferred_element_type=jnp.float32).astype(jnp.bfloat16)  # (S*B, Hp)
    # TODO(synk): training-mode dropout (random mask on x) not implemented; eval
    # semantics (identity) are used.

    # ---- Hoisted input projections: two big bf16 MXU matmuls cover all timesteps.
    # GA holds forward-gate columns (+ biases), GB backward-gate columns; the
    # backward direction reads GB at time S-1-t, so nothing is materialized twice.
    GA = (jnp.dot(x, wih_a_ref[...], preferred_element_type=jnp.float32)
          + bih_ref[...])                                           # (S*B, 6Hp) f32
    GB = jnp.dot(x, wih_b_ref[...], preferred_element_type=jnp.float32)

    whh = whh_ref[...]                                              # (2Hp, 6Hp) bf16
    # Hoist the n-gate recurrent-bias broadcast out of the loop (JAX does not CSE it).
    bhhn = jnp.broadcast_to(bhhn_ref[...], (B, H2P))                # (B, 2Hp) f32

    # ---- Serial recurrence, fully unrolled (S small and static). ----
    # Carry holds both directions: h = [h_fwd | h_bwd], shape (B, 2Hp) = (8, 128).
    h = jnp.zeros((B, H2P), jnp.float32)
    hs = []
    for t in range(S):
        gh = jnp.dot(h.astype(jnp.bfloat16), whh,
                     preferred_element_type=jnp.float32)            # (B, 6Hp) f32
        gi = GA[t * B:(t + 1) * B, :] + GB[(S - 1 - t) * B:(S - t) * B, :]
        # One EUP dispatch over the contiguous 256-lane [r|z] block, then split on
        # 128-lane boundaries (whole-vreg slices thanks to Hp padding).
        rz = jax.nn.sigmoid(gi[:, :2 * H2P] + gh[:, :2 * H2P])
        r = rz[:, :H2P]
        z = rz[:, H2P:]
        n = jnp.tanh(gi[:, 2 * H2P:] + r * (gh[:, 2 * H2P:] + bhhn))
        h = (1.0 - z) * n + z * h
        hs.append(h)

    # ---- Single lane-dense store of all outputs (no per-step masked stores).
    # Output time t: forward state after step t, backward state after step S-1-t.
    out_ref[...] = jnp.concatenate(
        [jnp.concatenate([hs[t][:, :HP], hs[S - 1 - t][:, HP:]], axis=1)
         for t in range(S)],
        axis=0)                                                     # (S*B, 2Hp)

    # hidden = tanh(fc(cat(h_fwd_final, h_bwd_final))); the carry is already [h_f|h_b].
    hid_ref[...] = jnp.tanh(
        jnp.dot(h.astype(jnp.bfloat16), wfc_ref[...],
                preferred_element_type=jnp.float32) + bfc_ref[...])


def init_params(hidden_dim: int, pad_idx: int, key):
    """PyTorch-layout parameters (gate order r, z, n)."""
    H = hidden_dim
    k = jax.random.split(key, 12)
    bound = 1.0 / jnp.sqrt(H)

    def u(kk, shape):
        return jax.random.uniform(kk, shape, jnp.float32, -bound, bound)

    emb = u(k[0], (H, H))                      # nn.Embedding(hidden_dim, hidden_dim)
    emb = emb.at[pad_idx].set(0.0)             # padding_idx row is zero

    return dict(
        embedding=emb,
        # forward direction
        w_ih_f=u(k[1], (3 * H, H)), w_hh_f=u(k[2], (3 * H, H)),
        b_ih_f=u(k[3], (3 * H,)),   b_hh_f=u(k[4], (3 * H,)),
        # backward direction
        w_ih_b=u(k[5], (3 * H, H)), w_hh_b=u(k[6], (3 * H, H)),
        b_ih_b=u(k[7], (3 * H,)),   b_hh_b=u(k[8], (3 * H,)),
        # fc: Linear(2H -> H)
        w_fc=u(k[9], (H, 2 * H)),   b_fc=u(k[10], (H,)),
    )


def fuse_params(params, *, batch_pad=8, hidden_pad=64, pad_idx=1):
    """One-time fusion/padding/transposition into kernel layout (init time, not per call).

    * hidden padded H -> Hp so every gate-pair block is 2*Hp = 128 lanes wide,
    * gate column layout: [r_f | r_b | z_f | z_b | n_f | n_b], each block Hp wide,
    * padded weight rows/cols and padded bias entries are zero so padded hidden
      lanes stay exactly zero through the recurrence,
    * b_hh for r/z folded into b_ih (the n-gate b_hh must stay: PyTorch scales it by r),
    * matmul operands stored in bf16, biases in f32.
    """
    H = params['w_fc'].shape[0]
    HP = hidden_pad

    def gate_cols(g, direction):               # g in {0:r, 1:z, 2:n}; direction 0=fwd,1=bwd
        start = (2 * g + direction) * HP
        return start, start + H

    def fuse_ih(w, direction):                 # w: (3H, H) PyTorch [W_r; W_z; W_n]
        out = jnp.zeros((HP, 6 * HP), jnp.float32)
        for g in range(3):
            c0, c1 = gate_cols(g, direction)
            out = out.at[:H, c0:c1].set(w[g * H:(g + 1) * H, :].T)
        return out

    wih_a = fuse_ih(params['w_ih_f'], 0)
    wih_b = fuse_ih(params['w_ih_b'], 1)

    whh = jnp.zeros((2 * HP, 6 * HP), jnp.float32)
    for g in range(3):
        c0, c1 = gate_cols(g, 0)
        whh = whh.at[:H, c0:c1].set(params['w_hh_f'][g * H:(g + 1) * H, :].T)
        c0, c1 = gate_cols(g, 1)
        whh = whh.at[HP:HP + H, c0:c1].set(params['w_hh_b'][g * H:(g + 1) * H, :].T)

    bih = jnp.zeros((6 * HP,), jnp.float32)
    for g in range(3):
        bf = params['b_ih_f'][g * H:(g + 1) * H]
        bb = params['b_ih_b'][g * H:(g + 1) * H]
        if g < 2:                              # r, z: fold recurrent bias in here
            bf = bf + params['b_hh_f'][g * H:(g + 1) * H]
            bb = bb + params['b_hh_b'][g * H:(g + 1) * H]
        c0, c1 = gate_cols(g, 0); bih = bih.at[c0:c1].set(bf)
        c0, c1 = gate_cols(g, 1); bih = bih.at[c0:c1].set(bb)

    bhhn = jnp.zeros((2 * HP,), jnp.float32)
    bhhn = bhhn.at[:H].set(params['b_hh_f'][2 * H:])
    bhhn = bhhn.at[HP:HP + H].set(params['b_hh_b'][2 * H:])

    wfc = jnp.zeros((2 * HP, HP), jnp.float32)
    wfc = wfc.at[:H, :H].set(params['w_fc'][:, :H].T)
    wfc = wfc.at[HP:HP + H, :H].set(params['w_fc'][:, H:].T)
    bfc = jnp.zeros((HP,), jnp.float32).at[:H].set(params['b_fc'])

    V = params['embedding'].shape[0]
    emb = jnp.zeros((V, HP), jnp.float32).at[:, :H].set(params['embedding'])

    bf16 = jnp.bfloat16
    return dict(
        embedding=emb.astype(bf16),
        wih_a=wih_a.astype(bf16), wih_b=wih_b.astype(bf16), whh=whh.astype(bf16),
        bih=bih[None, :], bhhn=bhhn[None, :],
        wfc=wfc.astype(bf16), bfc=bfc[None, :],
        hidden=H, hidden_pad=HP, batch_pad=batch_pad, pad_idx=pad_idx,
    )


def encoder_forward(src_ids, fused):
    """src_ids: (S, B) int32.  Returns (outputs (S, B, 2H), hidden (B, H))."""
    S, B = src_ids.shape
    H, HP, BP = fused['hidden'], fused['hidden_pad'], fused['batch_pad']
    V = fused['embedding'].shape[0]

    # Pad batch to a full sublane group; only token ids cross the HBM boundary.
    ids_p = jnp.full((S, BP), fused['pad_idx'], jnp.int32).at[:, :B].set(src_ids)
    ids_flat = ids_p.reshape(S * BP, 1)

    vmem = pl.BlockSpec(memory_space=pltpu.MemorySpace.VMEM)
    kernel = functools.partial(encoder_kernel, seq_len=S, batch_pad=BP,
                               hidden_pad=HP, vocab=V)
    out_flat, hid_p = pl.pallas_call(
        kernel,
        out_shape=(
            jax.ShapeDtypeStruct((S * BP, 2 * HP), jnp.float32),
            jax.ShapeDtypeStruct((BP, HP), jnp.float32),
        ),
        in_specs=[vmem] * 9,
        out_specs=(vmem, vmem),
    )(ids_flat, fused['embedding'], fused['wih_a'], fused['wih_b'], fused['bih'],
      fused['whh'], fused['bhhn'], fused['wfc'], fused['bfc'])

    out = out_flat.reshape(S, BP, 2 * HP)                 # metadata reshape
    outputs = jnp.concatenate([out[:, :B, :H], out[:, :B, HP:HP + H]], axis=-1)
    hidden = hid_p[:B, :H]
    return outputs, hidden


def encoder_reference(src_ids, params):
    """Pure-JAX reference with PyTorch GRU semantics (for correctness check)."""
    embedded = params['embedding'][src_ids]              # (S, B, H)
    S, B, H = embedded.shape
    hp = lax.Precision.HIGHEST

    def cell(x_t, h, w_ih, w_hh, b_ih, b_hh):
        gi = jnp.dot(x_t, w_ih.T, precision=hp) + b_ih
        gh = jnp.dot(h, w_hh.T, precision=hp) + b_hh
        i_r, i_z, i_n = gi[:, :H], gi[:, H:2 * H], gi[:, 2 * H:]
        h_r, h_z, h_n = gh[:, :H], gh[:, H:2 * H], gh[:, 2 * H:]
        r = jax.nn.sigmoid(i_r + h_r)
        z = jax.nn.sigmoid(i_z + h_z)
        n = jnp.tanh(i_n + r * h_n)
        return (1.0 - z) * n + z * h

    def run(xs, w_ih, w_hh, b_ih, b_hh):
        def step(h, x_t):
            h = cell(x_t, h, w_ih, w_hh, b_ih, b_hh)
            return h, h
        return lax.scan(step, jnp.zeros((B, H), jnp.float32), xs)

    h_f, out_f = run(embedded, params['w_ih_f'], params['w_hh_f'],
                     params['b_ih_f'], params['b_hh_f'])
    h_b, out_b_rev = run(embedded[::-1], params['w_ih_b'], params['w_hh_b'],
                         params['b_ih_b'], params['b_hh_b'])
    outputs = jnp.concatenate([out_f, out_b_rev[::-1]], axis=-1)
    hidden = jnp.tanh(jnp.dot(jnp.concatenate([h_f, h_b], axis=1),
                              params['w_fc'].T, precision=hp) + params['b_fc'])
    return outputs, hidden


if __name__ == "__main__":
    HIDDEN = 32
    SEQ = 8
    BATCH = 2
    PAD_IDX = 1

    key = jax.random.PRNGKey(0)
    k_param, k_src = jax.random.split(key)

    params = init_params(HIDDEN, PAD_IDX, k_param)
    # One-time fusion/padding: batch -> 8 sublanes, hidden 32 -> 64 so 2H = 128 lanes.
    fused = fuse_params(params, batch_pad=8, hidden_pad=64, pad_idx=PAD_IDX)
    # vocab size == hidden_dim (per nn.Embedding(hidden_dim, hidden_dim))
    src = jax.random.randint(k_src, (SEQ, BATCH), 0, HIDDEN, dtype=jnp.int32)

    outputs, hidden = encoder_forward(src, fused)
    jax.block_until_ready((outputs, hidden))

    assert outputs.shape == (SEQ, BATCH, 2 * HIDDEN)
    assert hidden.shape == (BATCH, HIDDEN)

    ref_out, ref_hid = encoder_reference(src, params)
    assert jnp.allclose(outputs, ref_out, atol=5e-2, rtol=5e-2)
    assert jnp.allclose(hidden, ref_hid, atol=5e-2, rtol=5e-2)

    print("KERNEL_OK")
</pallas_src>

<mosaic_0001>
module attributes {stable_mosaic.version = 11 : i64} {
  func.func @encoder_kernel(%arg0: memref<64x1xi32, #tpu.memory_space<vmem>>, %arg1: memref<32x64xbf16, #tpu.memory_space<vmem>>, %arg2: memref<64x384xbf16, #tpu.memory_space<vmem>>, %arg3: memref<64x384xbf16, #tpu.memory_space<vmem>>, %arg4: memref<1x384xf32, #tpu.memory_space<vmem>>, %arg5: memref<128x384xbf16, #tpu.memory_space<vmem>>, %arg6: memref<1x128xf32, #tpu.memory_space<vmem>>, %arg7: memref<128x64xbf16, #tpu.memory_space<vmem>>, %arg8: memref<1x64xf32, #tpu.memory_space<vmem>>, %arg9: memref<64x128xf32, #tpu.memory_space<vmem>>, %arg10: memref<8x64xf32, #tpu.memory_space<vmem>>) attributes {dimension_semantics = [], scalar_prefetch = 0 : i64, scratch_operands = 0 : i64, tpu.core_type = #tpu.core_type<tc>} {
    %c0 = arith.constant 0 : index
    %c0_0 = arith.constant 0 : index
    %0 = vector.load %arg0[%c0, %c0_0] : memref<64x1xi32, #tpu.memory_space<vmem>>, vector<64x1xi32>
    %1 = tpu.iota {dimensions = array<i32: 1>} : vector<64x32xi32>
    %2 = vector.shape_cast %0 : vector<64x1xi32> to vector<64x1xi32>
    %3 = vector.broadcast %2 : vector<64x1xi32> to vector<64x32xi32>
    %4 = arith.cmpi eq, %3, %1 : vector<64x32xi32>
    %cst = arith.constant 1.000000e+00 : f32
    %cst_1 = arith.constant 0.000000e+00 : f32
    %5 = vector.broadcast %cst : f32 to vector<64x32xf32>
    %6 = vector.broadcast %cst_1 : f32 to vector<64x32xf32>
    %7 = arith.select %4, %5, %6 : vector<64x32xi1>, vector<64x32xf32>
    %8 = arith.truncf %7 : vector<64x32xf32> to vector<64x32xbf16>
    %c0_2 = arith.constant 0 : index
    %c0_3 = arith.constant 0 : index
    %9 = vector.load %arg1[%c0_2, %c0_3] : memref<32x64xbf16, #tpu.memory_space<vmem>>, vector<32x64xbf16>
    %cst_4 = arith.constant dense<0.000000e+00> : vector<64x64xf32>
    %10 = tpu.matmul %8, %9, %cst_4 {dimension_numbers = #tpu.dot_dimension_numbers<[1], [0], [0], [1], [0, 0, 1, 1], [], []>} : vector<64x32xbf16>, vector<32x64xbf16>, vector<64x64xf32> -> vector<64x64xf32>
    %11 = arith.truncf %10 : vector<64x64xf32> to vector<64x64xbf16>
    %c0_5 = arith.constant 0 : index
    %c0_6 = arith.constant 0 : index
    %12 = vector.load %arg2[%c0_5, %c0_6] : memref<64x384xbf16, #tpu.memory_space<vmem>>, vector<64x384xbf16>
    %cst_7 = arith.constant dense<0.000000e+00> : vector<64x384xf32>
    %13 = tpu.matmul %11, %12, %cst_7 {dimension_numbers = #tpu.dot_dimension_numbers<[1], [0], [0], [1], [0, 0, 1, 1], [], []>} : vector<64x64xbf16>, vector<64x384xbf16>, vector<64x384xf32> -> vector<64x384xf32>
    %c0_8 = arith.constant 0 : index
    %c0_9 = arith.constant 0 : index
    %14 = vector.load %arg4[%c0_8, %c0_9] : memref<1x384xf32, #tpu.memory_space<vmem>>, vector<1x384xf32>
    %15 = vector.broadcast %14 : vector<1x384xf32> to vector<64x384xf32>
    %16 = arith.addf %13, %15 : vector<64x384xf32>
    %c0_10 = arith.constant 0 : index
    %c0_11 = arith.constant 0 : index
    %17 = vector.load %arg3[%c0_10, %c0_11] : memref<64x384xbf16, #tpu.memory_space<vmem>>, vector<64x384xbf16>
    %cst_12 = arith.constant dense<0.000000e+00> : vector<64x384xf32>
    %18 = tpu.matmul %11, %17, %cst_12 {dimension_numbers = #tpu.dot_dimension_numbers<[1], [0], [0], [1], [0, 0, 1, 1], [], []>} : vector<64x64xbf16>, vector<64x384xbf16>, vector<64x384xf32> -> vector<64x384xf32>
    %c0_13 = arith.constant 0 : index
    %c0_14 = arith.constant 0 : index
    %19 = vector.load %arg5[%c0_13, %c0_14] : memref<128x384xbf16, #tpu.memory_space<vmem>>, vector<128x384xbf16>
    %c0_15 = arith.constant 0 : index
    %c0_16 = arith.constant 0 : index
    %20 = vector.load %arg6[%c0_15, %c0_16] : memref<1x128xf32, #tpu.memory_space<vmem>>, vector<1x128xf32>
    %21 = vector.shape_cast %20 : vector<1x128xf32> to vector<1x128xf32>
    %22 = vector.broadcast %21 : vector<1x128xf32> to vector<8x128xf32>
    %cst_17 = arith.constant 0.000000e+00 : f32
    %23 = vector.broadcast %cst_17 : f32 to vector<8x128xf32>
    %24 = arith.truncf %23 : vector<8x128xf32> to vector<8x128xbf16>
    %cst_18 = arith.constant dense<0.000000e+00> : vector<8x384xf32>
    %25 = tpu.matmul %24, %19, %cst_18 {dimension_numbers = #tpu.dot_dimension_numbers<[1], [0], [0], [1], [0, 0, 1, 1], [], []>} : vector<8x128xbf16>, vector<128x384xbf16>, vector<8x384xf32> -> vector<8x384xf32>
    %26 = vector.extract_strided_slice %16 {offsets = [0, 0], sizes = [8, 384], strides = [1, 1]} : vector<64x384xf32> to vector<8x384xf32>
    %27 = vector.extract_strided_slice %18 {offsets = [56, 0], sizes = [8, 384], strides = [1, 1]} : vector<64x384xf32> to vector<8x384xf32>
    %28 = arith.addf %26, %27 : vector<8x384xf32>
    %29 = vector.extract_strided_slice %28 {offsets = [0, 0], sizes = [8, 256], strides = [1, 1]} : vector<8x384xf32> to vector<8x256xf32>
    %30 = vector.extract_strided_slice %25 {offsets = [0, 0], sizes = [8, 256], strides = [1, 1]} : vector<8x384xf32> to vector<8x256xf32>
    %31 = arith.addf %29, %30 : vector<8x256xf32>
    %32 = arith.negf %31 : vector<8x256xf32>
    %33 = math.exp %32 : vector<8x256xf32>
    %cst_19 = arith.constant 1.000000e+00 : f32
    %34 = vector.broadcast %cst_19 : f32 to vector<8x256xf32>
    %35 = arith.addf %34, %33 : vector<8x256xf32>
    %36 = arith.divf %34, %35 : vector<8x256xf32>
    %37 = vector.extract_strided_slice %36 {offsets = [0, 0], sizes = [8, 128], strides = [1, 1]} : vector<8x256xf32> to vector<8x128xf32>
    %38 = vector.extract_strided_slice %36 {offsets = [0, 128], sizes = [8, 128], strides = [1, 1]} : vector<8x256xf32> to vector<8x128xf32>
    %39 = vector.extract_strided_slice %28 {offsets = [0, 256], sizes = [8, 128], strides = [1, 1]} : vector<8x384xf32> to vector<8x128xf32>
    %40 = vector.extract_strided_slice %25 {offsets = [0, 256], sizes = [8, 128], strides = [1, 1]} : vector<8x384xf32> to vector<8x128xf32>
    %41 = arith.addf %40, %22 : vector<8x128xf32>
    %42 = arith.mulf %37, %41 : vector<8x128xf32>
    %43 = arith.addf %39, %42 : vector<8x128xf32>
    %44 = math.tanh %43 : vector<8x128xf32>
    %cst_20 = arith.constant 1.000000e+00 : f32
    %45 = vector.broadcast %cst_20 : f32 to vector<8x128xf32>
    %46 = arith.subf %45, %38 : vector<8x128xf32>
    %47 = arith.mulf %46, %44 : vector<8x128xf32>
    %48 = arith.mulf %38, %23 : vector<8x128xf32>
    %49 = arith.addf %47, %48 : vector<8x128xf32>
    %50 = arith.truncf %49 : vector<8x128xf32> to vector<8x128xbf16>
    %cst_21 = arith.constant dense<0.000000e+00> : vector<8x384xf32>
    %51 = tpu.matmul %50, %19, %cst_21 {dimension_numbers = #tpu.dot_dimension_numbers<[1], [0], [0], [1], [0, 0, 1, 1], [], []>} : vector<8x128xbf16>, vector<128x384xbf16>, vector<8x384xf32> -> vector<8x384xf32>
    %52 = vector.extract_strided_slice %16 {offsets = [8, 0], sizes = [8, 384], strides = [1, 1]} : vector<64x384xf32> to vector<8x384xf32>
    %53 = vector.extract_strided_slice %18 {offsets = [48, 0], sizes = [8, 384], strides = [1, 1]} : vector<64x384xf32> to vector<8x384xf32>
    %54 = arith.addf %52, %53 : vector<8x384xf32>
    %55 = vector.extract_strided_slice %54 {offsets = [0, 0], sizes = [8, 256], strides = [1, 1]} : vector<8x384xf32> to vector<8x256xf32>
    %56 = vector.extract_strided_slice %51 {offsets = [0, 0], sizes = [8, 256], strides = [1, 1]} : vector<8x384xf32> to vector<8x256xf32>
    %57 = arith.addf %55, %56 : vector<8x256xf32>
    %58 = arith.negf %57 : vector<8x256xf32>
    %59 = math.exp %58 : vector<8x256xf32>
    %cst_22 = arith.constant 1.000000e+00 : f32
    %60 = vector.broadcast %cst_22 : f32 to vector<8x256xf32>
    %61 = arith.addf %60, %59 : vector<8x256xf32>
    %62 = arith.divf %60, %61 : vector<8x256xf32>
    %63 = vector.extract_strided_slice %62 {offsets = [0, 0], sizes = [8, 128], strides = [1, 1]} : vector<8x256xf32> to vector<8x128xf32>
    %64 = vector.extract_strided_slice %62 {offsets = [0, 128], sizes = [8, 128], strides = [1, 1]} : vector<8x256xf32> to vector<8x128xf32>
    %65 = vector.extract_strided_slice %54 {offsets = [0, 256], sizes = [8, 128], strides = [1, 1]} : vector<8x384xf32> to vector<8x128xf32>
    %66 = vector.extract_strided_slice %51 {offsets = [0, 256], sizes = [8, 128], strides = [1, 1]} : vector<8x384xf32> to vector<8x128xf32>
    %67 = arith.addf %66, %22 : vector<8x128xf32>
    %68 = arith.mulf %63, %67 : vector<8x128xf32>
    %69 = arith.addf %65, %68 : vector<8x128xf32>
    %70 = math.tanh %69 : vector<8x128xf32>
    %cst_23 = arith.constant 1.000000e+00 : f32
    %71 = vector.broadcast %cst_23 : f32 to vector<8x128xf32>
    %72 = arith.subf %71, %64 : vector<8x128xf32>
    %73 = arith.mulf %72, %70 : vector<8x128xf32>
    %74 = arith.mulf %64, %49 : vector<8x128xf32>
    %75 = arith.addf %73, %74 : vector<8x128xf32>
    %76 = arith.truncf %75 : vector<8x128xf32> to vector<8x128xbf16>
    %cst_24 = arith.constant dense<0.000000e+00> : vector<8x384xf32>
    %77 = tpu.matmul %76, %19, %cst_24 {dimension_numbers = #tpu.dot_dimension_numbers<[1], [0], [0], [1], [0, 0, 1, 1], [], []>} : vector<8x128xbf16>, vector<128x384xbf16>, vector<8x384xf32> -> vector<8x384xf32>
    %78 = vector.extract_strided_slice %16 {offsets = [16, 0], sizes = [8, 384], strides = [1, 1]} : vector<64x384xf32> to vector<8x384xf32>
    %79 = vector.extract_strided_slice %18 {offsets = [40, 0], sizes = [8, 384], strides = [1, 1]} : vector<64x384xf32> to vector<8x384xf32>
    %80 = arith.addf %78, %79 : vector<8x384xf32>
    %81 = vector.extract_strided_slice %80 {offsets = [0, 0], sizes = [8, 256], strides = [1, 1]} : vector<8x384xf32> to vector<8x256xf32>
    %82 = vector.extract_strided_slice %77 {offsets = [0, 0], sizes = [8, 256], strides = [1, 1]} : vector<8x384xf32> to vector<8x256xf32>
    %83 = arith.addf %81, %82 : vector<8x256xf32>
    %84 = arith.negf %83 : vector<8x256xf32>
    %85 = math.exp %84 : vector<8x256xf32>
    %cst_25 = arith.constant 1.000000e+00 : f32
    %86 = vector.broadcast %cst_25 : f32 to vector<8x256xf32>
    %87 = arith.addf %86, %85 : vector<8x256xf32>
    %88 = arith.divf %86, %87 : vector<8x256xf32>
    %89 = vector.extract_strided_slice %88 {offsets = [0, 0], sizes = [8, 128], strides = [1, 1]} : vector<8x256xf32> to vector<8x128xf32>
    %90 = vector.extract_strided_slice %88 {offsets = [0, 128], sizes = [8, 128], strides = [1, 1]} : vector<8x256xf32> to vector<8x128xf32>
    %91 = vector.extract_strided_slice %80 {offsets = [0, 256], sizes = [8, 128], strides = [1, 1]} : vector<8x384xf32> to vector<8x128xf32>
    %92 = vector.extract_strided_slice %77 {offsets = [0, 256], sizes = [8, 128], strides = [1, 1]} : vector<8x384xf32> to vector<8x128xf32>
    %93 = arith.addf %92, %22 : vector<8x128xf32>
    %94 = arith.mulf %89, %93 : vector<8x128xf32>
    %95 = arith.addf %91, %94 : vector<8x128xf32>
    %96 = math.tanh %95 : vector<8x128xf32>
    %cst_26 = arith.constant 1.000000e+00 : f32
    %97 = vector.broadcast %cst_26 : f32 to vector<8x128xf32>
    %98 = arith.subf %97, %90 : vector<8x128xf32>
    %99 = arith.mulf %98, %96 : vector<8x128xf32>
    %100 = arith.mulf %90, %75 : vector<8x128xf32>
    %101 = arith.addf %99, %100 : vector<8x128xf32>
    %102 = arith.truncf %101 : vector<8x128xf32> to vector<8x128xbf16>
    %cst_27 = arith.constant dense<0.000000e+00> : vector<8x384xf32>
    %103 = tpu.matmul %102, %19, %cst_27 {dimension_numbers = #tpu.dot_dimension_numbers<[1], [0], [0], [1], [0, 0, 1, 1], [], []>} : vector<8x128xbf16>, vector<128x384xbf16>, vector<8x384xf32> -> vector<8x384xf32>
    %104 = vector.extract_strided_slice %16 {offsets = [24, 0], sizes = [8, 384], strides = [1, 1]} : vector<64x384xf32> to vector<8x384xf32>
    %105 = vector.extract_strided_slice %18 {offsets = [32, 0], sizes = [8, 384], strides = [1, 1]} : vector<64x384xf32> to vector<8x384xf32>
    %106 = arith.addf %104, %105 : vector<8x384xf32>
    %107 = vector.extract_strided_slice %106 {offsets = [0, 0], sizes = [8, 256], strides = [1, 1]} : vector<8x384xf32> to vector<8x256xf32>
    %108 = vector.extract_strided_slice %103 {offsets = [0, 0], sizes = [8, 256], strides = [1, 1]} : vector<8x384xf32> to vector<8x256xf32>
    %109 = arith.addf %107, %108 : vector<8x256xf32>
    %110 = arith.negf %109 : vector<8x256xf32>
    %111 = math.exp %110 : vector<8x256xf32>
    %cst_28 = arith.constant 1.000000e+00 : f32
    %112 = vector.broadcast %cst_28 : f32 to vector<8x256xf32>
    %113 = arith.addf %112, %111 : vector<8x256xf32>
    %114 = arith.divf %112, %113 : vector<8x256xf32>
    %115 = vector.extract_strided_slice %114 {offsets = [0, 0], sizes = [8, 128], strides = [1, 1]} : vector<8x256xf32> to vector<8x128xf32>
    %116 = vector.extract_strided_slice %114 {offsets = [0, 128], sizes = [8, 128], strides = [1, 1]} : vector<8x256xf32> to vector<8x128xf32>
    %117 = vector.extract_strided_slice %106 {offsets = [0, 256], sizes = [8, 128], strides = [1, 1]} : vector<8x384xf32> to vector<8x128xf32>
    %118 = vector.extract_strided_slice %103 {offsets = [0, 256], sizes = [8, 128], strides = [1, 1]} : vector<8x384xf32> to vector<8x128xf32>
    %119 = arith.addf %118, %22 : vector<8x128xf32>
    %120 = arith.mulf %115, %119 : vector<8x128xf32>
    %121 = arith.addf %117, %120 : vector<8x128xf32>
    %122 = math.tanh %121 : vector<8x128xf32>
    %cst_29 = arith.constant 1.000000e+00 : f32
    %123 = vector.broadcast %cst_29 : f32 to vector<8x128xf32>
    %124 = arith.subf %123, %116 : vector<8x128xf32>
    %125 = arith.mulf %124, %122 : vector<8x128xf32>
    %126 = arith.mulf %116, %101 : vector<8x128xf32>
    %127 = arith.addf %125, %126 : vector<8x128xf32>
    %128 = arith.truncf %127 : vector<8x128xf32> to vector<8x128xbf16>
    %cst_30 = arith.constant dense<0.000000e+00> : vector<8x384xf32>
    %129 = tpu.matmul %128, %19, %cst_30 {dimension_numbers = #tpu.dot_dimension_numbers<[1], [0], [0], [1], [0, 0, 1, 1], [], []>} : vector<8x128xbf16>, vector<128x384xbf16>, vector<8x384xf32> -> vector<8x384xf32>
    %130 = vector.extract_strided_slice %16 {offsets = [32, 0], sizes = [8, 384], strides = [1, 1]} : vector<64x384xf32> to vector<8x384xf32>
    %131 = vector.extract_strided_slice %18 {offsets = [24, 0], sizes = [8, 384], strides = [1, 1]} : vector<64x384xf32> to vector<8x384xf32>
    %132 = arith.addf %130, %131 : vector<8x384xf32>
    %133 = vector.extract_strided_slice %132 {offsets = [0, 0], sizes = [8, 256], strides = [1, 1]} : vector<8x384xf32> to vector<8x256xf32>
    %134 = vector.extract_strided_slice %129 {offsets = [0, 0], sizes = [8, 256], strides = [1, 1]} : vector<8x384xf32> to vector<8x256xf32>
    %135 = arith.addf %133, %134 : vector<8x256xf32>
    %136 = arith.negf %135 : vector<8x256xf32>
    %137 = math.exp %136 : vector<8x256xf32>
    %cst_31 = arith.constant 1.000000e+00 : f32
    %138 = vector.broadcast %cst_31 : f32 to vector<8x256xf32>
    %139 = arith.addf %138, %137 : vector<8x256xf32>
    %140 = arith.divf %138, %139 : vector<8x256xf32>
    %141 = vector.extract_strided_slice %140 {offsets = [0, 0], sizes = [8, 128], strides = [1, 1]} : vector<8x256xf32> to vector<8x128xf32>
    %142 = vector.extract_strided_slice %140 {offsets = [0, 128], sizes = [8, 128], strides = [1, 1]} : vector<8x256xf32> to vector<8x128xf32>
    %143 = vector.extract_strided_slice %132 {offsets = [0, 256], sizes = [8, 128], strides = [1, 1]} : vector<8x384xf32> to vector<8x128xf32>
    %144 = vector.extract_strided_slice %129 {offsets = [0, 256], sizes = [8, 128], strides = [1, 1]} : vector<8x384xf32> to vector<8x128xf32>
    %145 = arith.addf %144, %22 : vector<8x128xf32>
    %146 = arith.mulf %141, %145 : vector<8x128xf32>
    %147 = arith.addf %143, %146 : vector<8x128xf32>
    %148 = math.tanh %147 : vector<8x128xf32>
    %cst_32 = arith.constant 1.000000e+00 : f32
    %149 = vector.broadcast %cst_32 : f32 to vector<8x128xf32>
    %150 = arith.subf %149, %142 : vector<8x128xf32>
    %151 = arith.mulf %150, %148 : vector<8x128xf32>
    %152 = arith.mulf %142, %127 : vector<8x128xf32>
    %153 = arith.addf %151, %152 : vector<8x128xf32>
    %154 = arith.truncf %153 : vector<8x128xf32> to vector<8x128xbf16>
    %cst_33 = arith.constant dense<0.000000e+00> : vector<8x384xf32>
    %155 = tpu.matmul %154, %19, %cst_33 {dimension_numbers = #tpu.dot_dimension_numbers<[1], [0], [0], [1], [0, 0, 1, 1], [], []>} : vector<8x128xbf16>, vector<128x384xbf16>, vector<8x384xf32> -> vector<8x384xf32>
    %156 = vector.extract_strided_slice %16 {offsets = [40, 0], sizes = [8, 384], strides = [1, 1]} : vector<64x384xf32> to vector<8x384xf32>
    %157 = vector.extract_strided_slice %18 {offsets = [16, 0], sizes = [8, 384], strides = [1, 1]} : vector<64x384xf32> to vector<8x384xf32>
    %158 = arith.addf %156, %157 : vector<8x384xf32>
    %159 = vector.extract_strided_slice %158 {offsets = [0, 0], sizes = [8, 256], strides = [1, 1]} : vector<8x384xf32> to vector<8x256xf32>
    %160 = vector.extract_strided_slice %155 {offsets = [0, 0], sizes = [8, 256], strides = [1, 1]} : vector<8x384xf32> to vector<8x256xf32>
    %161 = arith.addf %159, %160 : vector<8x256xf32>
    %162 = arith.negf %161 : vector<8x256xf32>
    %163 = math.exp %162 : vector<8x256xf32>
    %cst_34 = arith.constant 1.000000e+00 : f32
    %164 = vector.broadcast %cst_34 : f32 to vector<8x256xf32>
    %165 = arith.addf %164, %163 : vector<8x256xf32>
    %166 = arith.divf %164, %165 : vector<8x256xf32>
    %167 = vector.extract_strided_slice %166 {offsets = [0, 0], sizes = [8, 128], strides = [1, 1]} : vector<8x256xf32> to vector<8x128xf32>
    %168 = vector.extract_strided_slice %166 {offsets = [0, 128], sizes = [8, 128], strides = [1, 1]} : vector<8x256xf32> to vector<8x128xf32>
    %169 = vector.extract_strided_slice %158 {offsets = [0, 256], sizes = [8, 128], strides = [1, 1]} : vector<8x384xf32> to vector<8x128xf32>
    %170 = vector.extract_strided_slice %155 {offsets = [0, 256], sizes = [8, 128], strides = [1, 1]} : vector<8x384xf32> to vector<8x128xf32>
    %171 = arith.addf %170, %22 : vector<8x128xf32>
    %172 = arith.mulf %167, %171 : vector<8x128xf32>
    %173 = arith.addf %169, %172 : vector<8x128xf32>
    %174 = math.tanh %173 : vector<8x128xf32>
    %cst_35 = arith.constant 1.000000e+00 : f32
    %175 = vector.broadcast %cst_35 : f32 to vector<8x128xf32>
    %176 = arith.subf %175, %168 : vector<8x128xf32>
    %177 = arith.mulf %176, %174 : vector<8x128xf32>
    %178 = arith.mulf %168, %153 : vector<8x128xf32>
    %179 = arith.addf %177, %178 : vector<8x128xf32>
    %180 = arith.truncf %179 : vector<8x128xf32> to vector<8x128xbf16>
    %cst_36 = arith.constant dense<0.000000e+00> : vector<8x384xf32>
    %181 = tpu.matmul %180, %19, %cst_36 {dimension_numbers = #tpu.dot_dimension_numbers<[1], [0], [0], [1], [0, 0, 1, 1], [], []>} : vector<8x128xbf16>, vector<128x384xbf16>, vector<8x384xf32> -> vector<8x384xf32>
    %182 = vector.extract_strided_slice %16 {offsets = [48, 0], sizes = [8, 384], strides = [1, 1]} : vector<64x384xf32> to vector<8x384xf32>
    %183 = vector.extract_strided_slice %18 {offsets = [8, 0], sizes = [8, 384], strides = [1, 1]} : vector<64x384xf32> to vector<8x384xf32>
    %184 = arith.addf %182, %183 : vector<8x384xf32>
    %185 = vector.extract_strided_slice %184 {offsets = [0, 0], sizes = [8, 256], strides = [1, 1]} : vector<8x384xf32> to vector<8x256xf32>
    %186 = vector.extract_strided_slice %181 {offsets = [0, 0], sizes = [8, 256], strides = [1, 1]} : vector<8x384xf32> to vector<8x256xf32>
    %187 = arith.addf %185, %186 : vector<8x256xf32>
    %188 = arith.negf %187 : vector<8x256xf32>
    %189 = math.exp %188 : vector<8x256xf32>
    %cst_37 = arith.constant 1.000000e+00 : f32
    %190 = vector.broadcast %cst_37 : f32 to vector<8x256xf32>
    %191 = arith.addf %190, %189 : vector<8x256xf32>
    %192 = arith.divf %190, %191 : vector<8x256xf32>
    %193 = vector.extract_strided_slice %192 {offsets = [0, 0], sizes = [8, 128], strides = [1, 1]} : vector<8x256xf32> to vector<8x128xf32>
    %194 = vector.extract_strided_slice %192 {offsets = [0, 128], sizes = [8, 128], strides = [1, 1]} : vector<8x256xf32> to vector<8x128xf32>
    %195 = vector.extract_strided_slice %184 {offsets = [0, 256], sizes = [8, 128], strides = [1, 1]} : vector<8x384xf32> to vector<8x128xf32>
    %196 = vector.extract_strided_slice %181 {offsets = [0, 256], sizes = [8, 128], strides = [1, 1]} : vector<8x384xf32> to vector<8x128xf32>
    %197 = arith.addf %196, %22 : vector<8x128xf32>
    %198 = arith.mulf %193, %197 : vector<8x128xf32>
    %199 = arith.addf %195, %198 : vector<8x128xf32>
    %200 = math.tanh %199 : vector<8x128xf32>
    %cst_38 = arith.constant 1.000000e+00 : f32
    %201 = vector.broadcast %cst_38 : f32 to vector<8x128xf32>
    %202 = arith.subf %201, %194 : vector<8x128xf32>
    %203 = arith.mulf %202, %200 : vector<8x128xf32>
    %204 = arith.mulf %194, %179 : vector<8x128xf32>
    %205 = arith.addf %203, %204 : vector<8x128xf32>
    %206 = arith.truncf %205 : vector<8x128xf32> to vector<8x128xbf16>
    %cst_39 = arith.constant dense<0.000000e+00> : vector<8x384xf32>
    %207 = tpu.matmul %206, %19, %cst_39 {dimension_numbers = #tpu.dot_dimension_numbers<[1], [0], [0], [1], [0, 0, 1, 1], [], []>} : vector<8x128xbf16>, vector<128x384xbf16>, vector<8x384xf32> -> vector<8x384xf32>
    %208 = vector.extract_strided_slice %16 {offsets = [56, 0], sizes = [8, 384], strides = [1, 1]} : vector<64x384xf32> to vector<8x384xf32>
    %209 = vector.extract_strided_slice %18 {offsets = [0, 0], sizes = [8, 384], strides = [1, 1]} : vector<64x384xf32> to vector<8x384xf32>
    %210 = arith.addf %208, %209 : vector<8x384xf32>
    %211 = vector.extract_strided_slice %210 {offsets = [0, 0], sizes = [8, 256], strides = [1, 1]} : vector<8x384xf32> to vector<8x256xf32>
    %212 = vector.extract_strided_slice %207 {offsets = [0, 0], sizes = [8, 256], strides = [1, 1]} : vector<8x384xf32> to vector<8x256xf32>
    %213 = arith.addf %211, %212 : vector<8x256xf32>
    %214 = arith.negf %213 : vector<8x256xf32>
    %215 = math.exp %214 : vector<8x256xf32>
    %cst_40 = arith.constant 1.000000e+00 : f32
    %216 = vector.broadcast %cst_40 : f32 to vector<8x256xf32>
    %217 = arith.addf %216, %215 : vector<8x256xf32>
    %218 = arith.divf %216, %217 : vector<8x256xf32>
    %219 = vector.extract_strided_slice %218 {offsets = [0, 0], sizes = [8, 128], strides = [1, 1]} : vector<8x256xf32> to vector<8x128xf32>
    %220 = vector.extract_strided_slice %218 {offsets = [0, 128], sizes = [8, 128], strides = [1, 1]} : vector<8x256xf32> to vector<8x128xf32>
    %221 = vector.extract_strided_slice %210 {offsets = [0, 256], sizes = [8, 128], strides = [1, 1]} : vector<8x384xf32> to vector<8x128xf32>
    %222 = vector.extract_strided_slice %207 {offsets = [0, 256], sizes = [8, 128], strides = [1, 1]} : vector<8x384xf32> to vector<8x128xf32>
    %223 = arith.addf %222, %22 : vector<8x128xf32>
    %224 = arith.mulf %219, %223 : vector<8x128xf32>
    %225 = arith.addf %221, %224 : vector<8x128xf32>
    %226 = math.tanh %225 : vector<8x128xf32>
    %cst_41 = arith.constant 1.000000e+00 : f32
    %227 = vector.broadcast %cst_41 : f32 to vector<8x128xf32>
    %228 = arith.subf %227, %220 : vector<8x128xf32>
    %229 = arith.mulf %228, %226 : vector<8x128xf32>
    %230 = arith.mulf %220, %205 : vector<8x128xf32>
    %231 = arith.addf %229, %230 : vector<8x128xf32>
    %232 = vector.extract_strided_slice %49 {offsets = [0, 0], sizes = [8, 64], strides = [1, 1]} : vector<8x128xf32> to vector<8x64xf32>
    %233 = vector.extract_strided_slice %231 {offsets = [0, 64], sizes = [8, 64], strides = [1, 1]} : vector<8x128xf32> to vector<8x64xf32>
    %234 = tpu.concatenate %232, %233 in 1 : vector<8x64xf32>, vector<8x64xf32> -> vector<8x128xf32>
    %235 = vector.extract_strided_slice %75 {offsets = [0, 0], sizes = [8, 64], strides = [1, 1]} : vector<8x128xf32> to vector<8x64xf32>
    %236 = vector.extract_strided_slice %205 {offsets = [0, 64], sizes = [8, 64], strides = [1, 1]} : vector<8x128xf32> to vector<8x64xf32>
    %237 = tpu.concatenate %235, %236 in 1 : vector<8x64xf32>, vector<8x64xf32> -> vector<8x128xf32>
    %238 = vector.extract_strided_slice %101 {offsets = [0, 0], sizes = [8, 64], strides = [1, 1]} : vector<8x128xf32> to vector<8x64xf32>
    %239 = vector.extract_strided_slice %179 {offsets = [0, 64], sizes = [8, 64], strides = [1, 1]} : vector<8x128xf32> to vector<8x64xf32>
    %240 = tpu.concatenate %238, %239 in 1 : vector<8x64xf32>, vector<8x64xf32> -> vector<8x128xf32>
    %241 = vector.extract_strided_slice %127 {offsets = [0, 0], sizes = [8, 64], strides = [1, 1]} : vector<8x128xf32> to vector<8x64xf32>
    %242 = vector.extract_strided_slice %153 {offsets = [0, 64], sizes = [8, 64], strides = [1, 1]} : vector<8x128xf32> to vector<8x64xf32>
    %243 = tpu.concatenate %241, %242 in 1 : vector<8x64xf32>, vector<8x64xf32> -> vector<8x128xf32>
    %244 = vector.extract_strided_slice %153 {offsets = [0, 0], sizes = [8, 64], strides = [1, 1]} : vector<8x128xf32> to vector<8x64xf32>
    %245 = vector.extract_strided_slice %127 {offsets = [0, 64], sizes = [8, 64], strides = [1, 1]} : vector<8x128xf32> to vector<8x64xf32>
    %246 = tpu.concatenate %244, %245 in 1 : vector<8x64xf32>, vector<8x64xf32> -> vector<8x128xf32>
    %247 = vector.extract_strided_slice %179 {offsets = [0, 0], sizes = [8, 64], strides = [1, 1]} : vector<8x128xf32> to vector<8x64xf32>
    %248 = vector.extract_strided_slice %101 {offsets = [0, 64], sizes = [8, 64], strides = [1, 1]} : vector<8x128xf32> to vector<8x64xf32>
    %249 = tpu.concatenate %247, %248 in 1 : vector<8x64xf32>, vector<8x64xf32> -> vector<8x128xf32>
    %250 = vector.extract_strided_slice %205 {offsets = [0, 0], sizes = [8, 64], strides = [1, 1]} : vector<8x128xf32> to vector<8x64xf32>
    %251 = vector.extract_strided_slice %75 {offsets = [0, 64], sizes = [8, 64], strides = [1, 1]} : vector<8x128xf32> to vector<8x64xf32>
    %252 = tpu.concatenate %250, %251 in 1 : vector<8x64xf32>, vector<8x64xf32> -> vector<8x128xf32>
    %253 = vector.extract_strided_slice %231 {offsets = [0, 0], sizes = [8, 64], strides = [1, 1]} : vector<8x128xf32> to vector<8x64xf32>
    %254 = vector.extract_strided_slice %49 {offsets = [0, 64], sizes = [8, 64], strides = [1, 1]} : vector<8x128xf32> to vector<8x64xf32>
    %255 = tpu.concatenate %253, %254 in 1 : vector<8x64xf32>, vector<8x64xf32> -> vector<8x128xf32>
    %256 = tpu.concatenate %234, %237, %240, %243, %246, %249, %252, %255 in 0 : vector<8x128xf32>, vector<8x128xf32>, vector<8x128xf32>, vector<8x128xf32>, vector<8x128xf32>, vector<8x128xf32>, vector<8x128xf32>, vector<8x128xf32> -> vector<64x128xf32>
    %c0_42 = arith.constant 0 : index
    %c0_43 = arith.constant 0 : index
    %257 = vector.load %arg9[%c0_42, %c0_43] : memref<64x128xf32, #tpu.memory_space<vmem>>, vector<64x128xf32>
    tpu.vector_store %arg9[%c0_42, %c0_43], %256 {strides = array<i32>} : memref<64x128xf32, #tpu.memory_space<vmem>>, vector<64x128xf32>,
    %258 = arith.truncf %231 : vector<8x128xf32> to vector<8x128xbf16>
    %c0_44 = arith.constant 0 : index
    %c0_45 = arith.constant 0 : index
    %259 = vector.load %arg7[%c0_44, %c0_45] : memref<128x64xbf16, #tpu.memory_space<vmem>>, vector<128x64xbf16>
    %cst_46 = arith.constant dense<0.000000e+00> : vector<8x64xf32>
    %260 = tpu.matmul %258, %259, %cst_46 {dimension_numbers = #tpu.dot_dimension_numbers<[1], [0], [0], [1], [0, 0, 1, 1], [], []>} : vector<8x128xbf16>, vector<128x64xbf16>, vector<8x64xf32> -> vector<8x64xf32>
    %c0_47 = arith.constant 0 : index
    %c0_48 = arith.constant 0 : index
    %261 = vector.load %arg8[%c0_47, %c0_48] : memref<1x64xf32, #tpu.memory_space<vmem>>, vector<1x64xf32>
    %262 = vector.broadcast %261 : vector<1x64xf32> to vector<8x64xf32>
    %263 = arith.addf %260, %262 : vector<8x64xf32>
    %264 = math.tanh %263 : vector<8x64xf32>
    %c0_49 = arith.constant 0 : index
    %c0_50 = arith.constant 0 : index
    %265 = vector.load %arg10[%c0_49, %c0_50] : memref<8x64xf32, #tpu.memory_space<vmem>>, vector<8x64xf32>
    tpu.vector_store %arg10[%c0_49, %c0_50], %264 {strides = array<i32>} : memref<8x64xf32, #tpu.memory_space<vmem>>, vector<8x64xf32>,
    return
  }
}

</mosaic_0001>

<llo_original>
// kernel: tpu_custom_call.1
$region0: #{tpu_custom_call.1}
  #allocation0 [shape = 'u32[]', space=smem, size = 0x4, offset = 0x4, fixed_abs, tag = 'smem constant byte address 0x4 - core index']
  #allocation1 [shape = 'u32[72,128]{1,0:T(1,128)}', space=vmem, size = 0x9000, scoped, tag = 'internal scratch']
  %s0 = inlined_call_operand.vmem [shape: s32[64,1], index: 0, kind: input, shape index: {}]
  %s1 = inlined_call_operand.vmem [shape: bf16[32,64], index: 1, kind: input, shape index: {}]
  %s2 = inlined_call_operand.vmem [shape: bf16[64,384], index: 2, kind: input, shape index: {}]
  %s3 = inlined_call_operand.hbm [shape: bf16[64,384], index: 3, kind: input, shape index: {}]
  %s4 = inlined_call_operand.vmem [shape: f32[1,384], index: 4, kind: input, shape index: {}]
  %s5 = inlined_call_operand.hbm [shape: bf16[128,384], index: 5, kind: input, shape index: {}]
  %s6 = inlined_call_operand.vmem [shape: f32[1,128], index: 6, kind: input, shape index: {}]
  %s7 = inlined_call_operand.vmem [shape: bf16[128,64], index: 7, kind: input, shape index: {}]
  %s8 = inlined_call_operand.vmem [shape: f32[1,64], index: 8, kind: input, shape index: {}]
  %s9 = inlined_call_operand.hbm [shape: f32[64,128], index: 9, kind: output, shape index: {0}]
  %s10 = inlined_call_operand.hbm [shape: f32[8,64], index: 10, kind: output, shape index: {1}]
  %11 = xla_tuple %s9, %s10
  %s12 = sld [smem:[#allocation0]]
  $region62: #{tpu_custom_call.1} parent=0
    _
  %s14 = ssub.s32 1, %s12
  %s15 = scalar_select 0, %s14, %s12
  $region1: #{tpu_custom_call.1} parent=0
    #allocation2 [shape = 'u8[49152]{0}', space=vmem, size = 0xc000, scoped, tag = 'input window, operand 3, single buffered']
    #allocation3 [shape = 's32[1]{0}', space=sflag, size = 0x4, scoped, tag = 'scoped memory for tpu_custom_call.1']
    #allocation4 [shape = 's32[1]{0}', space=sflag, size = 0x4, scoped, tag = 'scoped memory for tpu_custom_call.1']
    #allocation5 [shape = 'u8[98304]{0}', space=vmem, size = 0x18000, scoped, tag = 'input window, operand 5, single buffered']
    #allocation6 [shape = 's32[1]{0}', space=sflag, size = 0x4, scoped, tag = 'scoped memory for tpu_custom_call.1']
    #allocation7 [shape = 'u8[32768]{0}', space=vmem, size = 0x8000, scoped, tag = 'output window, operand 0, single buffered']
    #allocation8 [shape = 'u8[4096]{0}', space=vmem, size = 0x1000, scoped, tag = 'output window, operand 1, single buffered']
    #allocation9 [shape = 's32[1]{0}', space=sflag, size = 0x4, scoped, tag = 'scoped memory for tpu_custom_call.1']
    %16 = vsyncpa [#allocation3], 0
    %17 = vsyncpa [#allocation6], 0
    %18 = vsyncpa [#allocation4], 0
    %19 = vsyncpa [#allocation9], 0
    // Predicated region
    $region2: #{tpu_custom_call.1} parent=1 // pred_check
      _
    $region3: #{tpu_custom_call.1} parent=1 // pred_check_branch
      %21 = sbr.rel (0) target = $region5
    $region4: #{tpu_custom_call.1} parent=1 // pred_region
      _
    $region5: #{tpu_custom_call.1} parent=1 // pred_fallthru
      _
    // Predicated region
    $region6: #{tpu_custom_call.1} parent=1 // pred_check
      _
    $region7: #{tpu_custom_call.1} parent=1 // pred_check_branch
      %23 = sbr.rel (0) target = $region9
    $region8: #{tpu_custom_call.1} parent=1 // pred_region
      _
    $region9: #{tpu_custom_call.1} parent=1 // pred_fallthru
      _
    // Predicated region
    $region10: #{tpu_custom_call.1} parent=1 // pred_check
      _
    $region11: #{tpu_custom_call.1} parent=1 // pred_check_branch
      %25 = sbr.rel (0) target = $region13
    $region12: #{tpu_custom_call.1} parent=1 // pred_region
      _
    $region13: #{tpu_custom_call.1} parent=1 // pred_fallthru
      _
    // Predicated region
    $region14: #{tpu_custom_call.1} parent=1 // pred_check
      _
    $region15: #{tpu_custom_call.1} parent=1 // pred_check_branch
      %27 = sbr.rel (0) target = $region17
    $region16: #{tpu_custom_call.1} parent=1 // pred_region
      %29 = vsyncadd [#allocation3], 0
      %s30 = sshll.u32 %s3, 4
      %s31 = int_to_ptr.hbm [resolvable:$true] %s30
      %s32 = sshll.u32 [#allocation2], 4
      %s33 = int_to_ptr.vmem [resolvable:$true] %s32
      %38 = dma.hbm_to_vmem [thread:$0]  %s31, 1536, %s33, [#allocation3], 192, 192, 12
    $region17: #{tpu_custom_call.1} parent=1 // pred_fallthru
      _
    // Predicated region
    $region18: #{tpu_custom_call.1} parent=1 // pred_check
      _
    $region19: #{tpu_custom_call.1} parent=1 // pred_check_branch
      %40 = sbr.rel (0) target = $region21
    $region20: #{tpu_custom_call.1} parent=1 // pred_region
      _
    $region21: #{tpu_custom_call.1} parent=1 // pred_fallthru
      _
    // Predicated region
    $region22: #{tpu_custom_call.1} parent=1 // pred_check
      _
    $region23: #{tpu_custom_call.1} parent=1 // pred_check_branch
      %42 = sbr.rel (0) target = $region25
    $region24: #{tpu_custom_call.1} parent=1 // pred_region
      %44 = vsyncadd [#allocation6], 0
      %s45 = sshll.u32 %s5, 4
      %s46 = int_to_ptr.hbm [resolvable:$true] %s45
      %s47 = sshll.u32 [#allocation5], 4
      %s48 = int_to_ptr.vmem [resolvable:$true] %s47
      %53 = dma.hbm_to_vmem [thread:$0]  %s46, 3072, %s48, [#allocation6], 192, 192, 12
    $region25: #{tpu_custom_call.1} parent=1 // pred_fallthru
      _
    // Predicated region
    $region26: #{tpu_custom_call.1} parent=1 // pred_check
      _
    $region27: #{tpu_custom_call.1} parent=1 // pred_check_branch
      %55 = sbr.rel (0) target = $region29
    $region28: #{tpu_custom_call.1} parent=1 // pred_region
      _
    $region29: #{tpu_custom_call.1} parent=1 // pred_fallthru
      _
    // Predicated region
    $region30: #{tpu_custom_call.1} parent=1 // pred_check
      _
    $region31: #{tpu_custom_call.1} parent=1 // pred_check_branch
      %57 = sbr.rel (0) target = $region33
    $region32: #{tpu_custom_call.1} parent=1 // pred_region
      _
    $region33: #{tpu_custom_call.1} parent=1 // pred_fallthru
      _
    // Predicated region
    $region34: #{tpu_custom_call.1} parent=1 // pred_check
      _
    $region35: #{tpu_custom_call.1} parent=1 // pred_check_branch
      %59 = sbr.rel (0) target = $region37
    $region36: #{tpu_custom_call.1} parent=1 // pred_region
      _
    $region37: #{tpu_custom_call.1} parent=1 // pred_fallthru
      _
    // Predicated region
    $region38: #{tpu_custom_call.1} parent=1 // pred_check
      _
    $region39: #{tpu_custom_call.1} parent=1 // pred_check_branch
      %61 = sbr.rel (0) target = $region41
    $region40: #{tpu_custom_call.1} parent=1 // pred_region
      %63 = dma.done [#allocation3], 1536
    $region41: #{tpu_custom_call.1} parent=1 // pred_fallthru
      _
    // Predicated region
    $region42: #{tpu_custom_call.1} parent=1 // pred_check
      _
    $region43: #{tpu_custom_call.1} parent=1 // pred_check_branch
      %65 = sbr.rel (0) target = $region45
    $region44: #{tpu_custom_call.1} parent=1 // pred_region
      %67 = dma.done [#allocation6], 3072
    $region45: #{tpu_custom_call.1} parent=1 // pred_fallthru
      _
    %v69 = vld [vmem:[%s0] sm:$0xff]
    %v70 = vld [vmem:[%s0 + $0x8] sm:$0xff]
    %v71 = vld [vmem:[%s0 + $0x10] sm:$0xff]
    %v72 = vld [vmem:[%s0 + $0x18] sm:$0xff]
    %v73 = vld [vmem:[%s0 + $0x20] sm:$0xff]
    %v74 = vld [vmem:[%s0 + $0x28] sm:$0xff]
    %v75 = vld [vmem:[%s0 + $0x30] sm:$0xff]
    %v76 = vld [vmem:[%s0 + $0x38] sm:$0xff]
    %v77 = vlaneseq
    %v78 = vand.u32 %v77, 127
    %79 = vset.pattern.permute.xlu0 0
    %80 = vperm.xlu0 %79, %v69
    %v81 = vpop.permute.xlu0 %80
    %82 = vset.pattern.permute.xlu0 0
    %83 = vperm.xlu0 %82, %v70
    %v84 = vpop.permute.xlu0 %83
    %85 = vset.pattern.permute.xlu0 0
    %86 = vperm.xlu0 %85, %v71
    %v87 = vpop.permute.xlu0 %86
    %88 = vset.pattern.permute.xlu0 0
    %89 = vperm.xlu0 %88, %v72
    %v90 = vpop.permute.xlu0 %89
    %91 = vset.pattern.permute.xlu0 0
    %92 = vperm.xlu0 %91, %v73
    %v93 = vpop.permute.xlu0 %92
    %94 = vset.pattern.permute.xlu0 0
    %95 = vperm.xlu0 %94, %v74
    %v96 = vpop.permute.xlu0 %95
    %97 = vset.pattern.permute.xlu0 0
    %98 = vperm.xlu0 %97, %v75
    %v99 = vpop.permute.xlu0 %98
    %100 = vset.pattern.permute.xlu0 0
    %101 = vperm.xlu0 %100, %v76
    %v102 = vpop.permute.xlu0 %101
    %vm103 = vcmp.eq.s32.totalorder %v81, %v78
    %vm104 = vcmp.eq.s32.totalorder %v84, %v78
    %vm105 = vcmp.eq.s32.totalorder %v87, %v78
    %vm106 = vcmp.eq.s32.totalorder %v90, %v78
    %vm107 = vcmp.eq.s32.totalorder %v93, %v78
    %vm108 = vcmp.eq.s32.totalorder %v96, %v78
    %vm109 = vcmp.eq.s32.totalorder %v99, %v78
    %vm110 = vcmp.eq.s32.totalorder %v102, %v78
    %v111 = vsel %vm103, 1.0, 0.0
    %v112 = vsel %vm104, 1.0, 0.0
    %v113 = vsel %vm105, 1.0, 0.0
    %v114 = vsel %vm106, 1.0, 0.0
    %v115 = vsel %vm107, 1.0, 0.0
    %v116 = vsel %vm108, 1.0, 0.0
    %v117 = vsel %vm109, 1.0, 0.0
    %v118 = vsel %vm110, 1.0, 0.0
    %v119 = vpack.c.bf16 %v112, %v111
    %v120 = vpack.c.bf16 %v114, %v113
    %v121 = vpack.c.bf16 %v116, %v115
    %v122 = vpack.c.bf16 %v118, %v117
    %v123 = vld [vmem:[%s1] sm:$0xf]
    %v124 = vld [vmem:[%s1 + $0x4] sm:$0xf]
    %v125 = vld [vmem:[%s1 + $0x8] sm:$0xf]
    %v126 = vld [vmem:[%s1 + $0xc] sm:$0xf]
    %v131 = vunpack.c.l.b16 %v123
    %v132 = vunpack.c.l.b16 %v124
    %v133 = vunpack.c.l.b16 %v125
    %v134 = vunpack.c.l.b16 %v126
    %v135 = vpack.c.b16 %v132, %v131
    %v136 = vpack.c.b16 %v134, %v133
    %vm139 = vcmask 261120
    %v141 = vsel %vm139, %v119, 0
    %v144 = vsel %vm139, %v120, 0
    %v147 = vsel %vm139, %v121, 0
    %v150 = vsel %vm139, %v122, 0
    %152 = vmatpush.bf16.msra.mxu0 0
    %153 = vmatpush.bf16.msra.mxu0 0
    %154 = vmatpush.bf16.msra.mxu0 0
    %155 = vmatpush.bf16.msra.mxu0 0
    %156 = vmatpush.bf16.msra.mxu0 0
    %157 = vmatpush.bf16.msra.mxu0 0
    %158 = vmatpush.bf16.msra.mxu0 %v136
    %159 = vmatpush.bf16.msra.mxu0 %v135
    %160 = vmatmul.bf16.gmra.mxu0 %v141
    %v161 = vpop.f32.mrf.mxu0
    %v162 = vadd.f32 0.0, %v161
    %v163 = vpop.f32.mrf.mxu0
    %v164 = vadd.f32 0.0, %v163
    %165 = vmatmul.bf16.gmra.mxu0 %v144
    %v166 = vpop.f32.mrf.mxu0
    %v167 = vadd.f32 0.0, %v166
    %v168 = vpop.f32.mrf.mxu0
    %v169 = vadd.f32 0.0, %v168
    %170 = vmatmul.bf16.gmra.mxu0 %v147
    %v171 = vpop.f32.mrf.mxu0
    %v172 = vadd.f32 0.0, %v171
    %v173 = vpop.f32.mrf.mxu0
    %v174 = vadd.f32 0.0, %v173
    %175 = vmatmul.bf16.gmra.mxu0 %v150
    %v176 = vpop.f32.mrf.mxu0
    %v177 = vadd.f32 0.0, %v176
    %v178 = vpop.f32.mrf.mxu0
    %v179 = vadd.f32 0.0, %v178
    %180 = vdwg.mxu0
    %v181 = vpack.c.bf16 %v164, %v162
    %v182 = vpack.c.bf16 %v169, %v167
    %v183 = vpack.c.bf16 %v174, %v172
    %v184 = vpack.c.bf16 %v179, %v177
    %v185 = vld [vmem:[%s2] sm:$0xff]
    %v186 = vld [vmem:[%s2 + $0x8] sm:$0xf]
    %v187 = vld [vmem:[%s2 + $0xc] sm:$0xff]
    %v188 = vld [vmem:[%s2 + $0x14] sm:$0xf]
    %v189 = vld [vmem:[%s2 + $0x18] sm:$0xff]
    %v190 = vld [vmem:[%s2 + $0x20] sm:$0xf]
    %v191 = vld [vmem:[%s2 + $0x24] sm:$0xff]
    %v192 = vld [vmem:[%s2 + $0x2c] sm:$0xf]
    %v193 = vld [vmem:[%s2 + $0x30] sm:$0xff]
    %v194 = vld [vmem:[%s2 + $0x38] sm:$0xf]
    %v195 = vld [vmem:[%s2 + $0x3c] sm:$0xff]
    %v196 = vld [vmem:[%s2 + $0x44] sm:$0xf]
    %v197 = vld [vmem:[%s2 + $0x48] sm:$0xff]
    %v198 = vld [vmem:[%s2 + $0x50] sm:$0xf]
    %v199 = vld [vmem:[%s2 + $0x54] sm:$0xff]
    %v200 = vld [vmem:[%s2 + $0x5c] sm:$0xf]
    %v201 = vld [vmem:[%s4] sm:$0x7]
    %v203 = vperm.slane %v201, 0
    %v204 = vperm.slane %v201, 1
    %v205 = vperm.slane %v201, 2
    %v225 = vunpack.c.l.b16 %v185
    %v226 = vunpack.c.h.b16 %v185
    %v227 = vunpack.c.l.b16 %v186
    %v228 = vunpack.c.l.b16 %v187
    %v229 = vunpack.c.h.b16 %v187
    %v230 = vunpack.c.l.b16 %v188
    %v231 = vunpack.c.l.b16 %v189
    %v232 = vunpack.c.h.b16 %v189
    %v233 = vunpack.c.l.b16 %v190
    %v234 = vunpack.c.l.b16 %v191
    %v235 = vunpack.c.h.b16 %v191
    %v236 = vunpack.c.l.b16 %v192
    %v237 = vunpack.c.l.b16 %v193
    %v238 = vunpack.c.h.b16 %v193
    %v239 = vunpack.c.l.b16 %v194
    %v240 = vunpack.c.l.b16 %v195
    %v241 = vunpack.c.h.b16 %v195
    %v242 = vunpack.c.l.b16 %v196
    %v243 = vunpack.c.l.b16 %v197
    %v244 = vunpack.c.h.b16 %v197
    %v245 = vunpack.c.l.b16 %v198
    %v246 = vunpack.c.l.b16 %v199
    %v247 = vunpack.c.h.b16 %v199
    %v248 = vunpack.c.l.b16 %v200
    %v249 = vpack.c.b16 %v228, %v225
    %v250 = vpack.c.b16 %v229, %v226
    %v251 = vpack.c.b16 %v230, %v227
    %v252 = vpack.c.b16 %v234, %v231
    %v253 = vpack.c.b16 %v235, %v232
    %v254 = vpack.c.b16 %v236, %v233
    %v255 = vpack.c.b16 %v240, %v237
    %v256 = vpack.c.b16 %v241, %v238
    %v257 = vpack.c.b16 %v242, %v239
    %v258 = vpack.c.b16 %v246, %v243
    %v259 = vpack.c.b16 %v247, %v244
    %v260 = vpack.c.b16 %v248, %v245
    %vm273 = vcmask 523264
    %v275 = vsel %vm273, %v181, 0
    %v278 = vsel %vm273, %v182, 0
    %v281 = vsel %vm273, %v183, 0
    %v284 = vsel %vm273, %v184, 0
    %286 = vmatpush.bf16.msra.mxu0 0
    %287 = vmatpush.bf16.msra.mxu0 0
    %288 = vmatpush.bf16.msra.mxu0 0
    %289 = vmatpush.bf16.msra.mxu0 0
    %290 = vmatpush.bf16.msra.mxu0 %v258
    %291 = vmatpush.bf16.msra.mxu0 %v255
    %292 = vmatpush.bf16.msra.mxu0 %v252
    %293 = vmatpush.bf16.msra.mxu0 %v249
    %294 = vmatmul.bf16.gmra.mxu0 %v275
    %v295 = vpop.f32.mrf.mxu0
    %v296 = vadd.f32 %v203, %v295
    %v297 = vpop.f32.mrf.mxu0
    %v298 = vadd.f32 %v203, %v297
    %299 = vmatmul.bf16.gmra.mxu0 %v278
    %v300 = vpop.f32.mrf.mxu0
    %v301 = vadd.f32 %v203, %v300
    %v302 = vpop.f32.mrf.mxu0
    %v303 = vadd.f32 %v203, %v302
    %304 = vmatmul.bf16.gmra.mxu0 %v281
    %v305 = vpop.f32.mrf.mxu0
    %v306 = vadd.f32 %v203, %v305
    %v307 = vpop.f32.mrf.mxu0
    %v308 = vadd.f32 %v203, %v307
    %309 = vmatmul.bf16.gmra.mxu0 %v284
    %v310 = vpop.f32.mrf.mxu0
    %v311 = vadd.f32 %v203, %v310
    %v312 = vpop.f32.mrf.mxu0
    %v313 = vadd.f32 %v203, %v312
    %314 = vdwg.mxu0
    %315 = vmatpush.bf16.msra.mxu0 0
    %316 = vmatpush.bf16.msra.mxu0 0
    %317 = vmatpush.bf16.msra.mxu0 0
    %318 = vmatpush.bf16.msra.mxu0 0
    %319 = vmatpush.bf16.msra.mxu0 %v259
    %320 = vmatpush.bf16.msra.mxu0 %v256
    %321 = vmatpush.bf16.msra.mxu0 %v253
    %322 = vmatpush.bf16.msra.mxu0 %v250
    %323 = vmatmul.bf16.gmra.mxu0 %v275
    %v324 = vpop.f32.mrf.mxu0
    %v325 = vadd.f32 %v204, %v324
    %v326 = vpop.f32.mrf.mxu0
    %v327 = vadd.f32 %v204, %v326
    %328 = vmatmul.bf16.gmra.mxu0 %v278
    %v329 = vpop.f32.mrf.mxu0
    %v330 = vadd.f32 %v204, %v329
    %v331 = vpop.f32.mrf.mxu0
    %v332 = vadd.f32 %v204, %v331
    %333 = vmatmul.bf16.gmra.mxu0 %v281
    %v334 = vpop.f32.mrf.mxu0
    %v335 = vadd.f32 %v204, %v334
    %v336 = vpop.f32.mrf.mxu0
    %v337 = vadd.f32 %v204, %v336
    %338 = vmatmul.bf16.gmra.mxu0 %v284
    %v339 = vpop.f32.mrf.mxu0
    %v340 = vadd.f32 %v204, %v339
    %v341 = vpop.f32.mrf.mxu0
    %v342 = vadd.f32 %v204, %v341
    %343 = vdwg.mxu0
    %344 = vmatpush.bf16.msra.mxu0 0
    %345 = vmatpush.bf16.msra.mxu0 0
    %346 = vmatpush.bf16.msra.mxu0 0
    %347 = vmatpush.bf16.msra.mxu0 0
    %348 = vmatpush.bf16.msra.mxu0 %v260
    %349 = vmatpush.bf16.msra.mxu0 %v257
    %350 = vmatpush.bf16.msra.mxu0 %v254
    %351 = vmatpush.bf16.msra.mxu0 %v251
    %352 = vmatmul.bf16.gmra.mxu0 %v275
    %v353 = vpop.f32.mrf.mxu0
    %v354 = vadd.f32 %v205, %v353
    %v355 = vpop.f32.mrf.mxu0
    %v356 = vadd.f32 %v205, %v355
    %357 = vmatmul.bf16.gmra.mxu0 %v278
    %v358 = vpop.f32.mrf.mxu0
    %v359 = vadd.f32 %v205, %v358
    %v360 = vpop.f32.mrf.mxu0
    %v361 = vadd.f32 %v205, %v360
    %362 = vmatmul.bf16.gmra.mxu0 %v281
    %v363 = vpop.f32.mrf.mxu0
    %v364 = vadd.f32 %v205, %v363
    %v365 = vpop.f32.mrf.mxu0
    %v366 = vadd.f32 %v205, %v365
    %367 = vmatmul.bf16.gmra.mxu0 %v284
    %v368 = vpop.f32.mrf.mxu0
    %v369 = vadd.f32 %v205, %v368
    %v370 = vpop.f32.mrf.mxu0
    %v371 = vadd.f32 %v205, %v370
    %372 = vdwg.mxu0
    %v373 = vld [vmem:[#allocation2] sm:$0xff]
    %v374 = vld [vmem:[#allocation2 + $0x8] sm:$0xf]
    %v375 = vld [vmem:[#allocation2 + $0xc] sm:$0xff]
    %v376 = vld [vmem:[#allocation2 + $0x14] sm:$0xf]
    %v377 = vld [vmem:[#allocation2 + $0x18] sm:$0xff]
    %v378 = vld [vmem:[#allocation2 + $0x20] sm:$0xf]
    %v379 = vld [vmem:[#allocation2 + $0x24] sm:$0xff]
    %v380 = vld [vmem:[#allocation2 + $0x2c] sm:$0xf]
    %v381 = vld [vmem:[#allocation2 + $0x30] sm:$0xff]
    %v382 = vld [vmem:[#allocation2 + $0x38] sm:$0xf]
    %v383 = vld [vmem:[#allocation2 + $0x3c] sm:$0xff]
    %v384 = vld [vmem:[#allocation2 + $0x44] sm:$0xf]
    %v385 = vld [vmem:[#allocation2 + $0x48] sm:$0xff]
    %v386 = vld [vmem:[#allocation2 + $0x50] sm:$0xf]
    %v387 = vld [vmem:[#allocation2 + $0x54] sm:$0xff]
    %v388 = vld [vmem:[#allocation2 + $0x5c] sm:$0xf]
    %v405 = vunpack.c.l.b16 %v373
    %v406 = vunpack.c.h.b16 %v373
    %v407 = vunpack.c.l.b16 %v374
    %v408 = vunpack.c.l.b16 %v375
    %v409 = vunpack.c.h.b16 %v375
    %v410 = vunpack.c.l.b16 %v376
    %v411 = vunpack.c.l.b16 %v377
    %v412 = vunpack.c.h.b16 %v377
    %v413 = vunpack.c.l.b16 %v378
    %v414 = vunpack.c.l.b16 %v379
    %v415 = vunpack.c.h.b16 %v379
    %v416 = vunpack.c.l.b16 %v380
    %v417 = vunpack.c.l.b16 %v381
    %v418 = vunpack.c.h.b16 %v381
    %v419 = vunpack.c.l.b16 %v382
    %v420 = vunpack.c.l.b16 %v383
    %v421 = vunpack.c.h.b16 %v383
    %v422 = vunpack.c.l.b16 %v384
    %v423 = vunpack.c.l.b16 %v385
    %v424 = vunpack.c.h.b16 %v385
    %v425 = vunpack.c.l.b16 %v386
    %v426 = vunpack.c.l.b16 %v387
    %v427 = vunpack.c.h.b16 %v387
    %v428 = vunpack.c.l.b16 %v388
    %v429 = vpack.c.b16 %v408, %v405
    %v430 = vpack.c.b16 %v409, %v406
    %v431 = vpack.c.b16 %v410, %v407
    %v432 = vpack.c.b16 %v414, %v411
    %v433 = vpack.c.b16 %v415, %v412
    %v434 = vpack.c.b16 %v416, %v413
    %v435 = vpack.c.b16 %v420, %v417
    %v436 = vpack.c.b16 %v421, %v418
    %v437 = vpack.c.b16 %v422, %v419
    %v438 = vpack.c.b16 %v426, %v423
    %v439 = vpack.c.b16 %v427, %v424
    %v440 = vpack.c.b16 %v428, %v425
    %453 = vmatpush.bf16.msra.mxu0 0
    %454 = vmatpush.bf16.msra.mxu0 0
    %455 = vmatpush.bf16.msra.mxu0 0
    %456 = vmatpush.bf16.msra.mxu0 0
    %457 = vmatpush.bf16.msra.mxu0 %v438
    %458 = vmatpush.bf16.msra.mxu0 %v435
    %459 = vmatpush.bf16.msra.mxu0 %v432
    %460 = vmatpush.bf16.msra.mxu0 %v429
    %461 = vmatmul.bf16.gmra.mxu0 %v275
    %v462 = vpop.f32.mrf.mxu0
    %v463 = vadd.f32 0.0, %v462
    %v464 = vpop.f32.mrf.mxu0
    %v465 = vadd.f32 0.0, %v464
    %466 = vmatmul.bf16.gmra.mxu0 %v278
    %v467 = vpop.f32.mrf.mxu0
    %v468 = vadd.f32 0.0, %v467
    %v469 = vpop.f32.mrf.mxu0
    %v470 = vadd.f32 0.0, %v469
    %471 = vmatmul.bf16.gmra.mxu0 %v281
    %v472 = vpop.f32.mrf.mxu0
    %v473 = vadd.f32 0.0, %v472
    %v474 = vpop.f32.mrf.mxu0
    %v475 = vadd.f32 0.0, %v474
    %476 = vmatmul.bf16.gmra.mxu0 %v284
    %v477 = vpop.f32.mrf.mxu0
    %v478 = vadd.f32 0.0, %v477
    %v479 = vpop.f32.mrf.mxu0
    %v480 = vadd.f32 0.0, %v479
    %481 = vdwg.mxu0
    %482 = vmatpush.bf16.msra.mxu0 0
    %483 = vmatpush.bf16.msra.mxu0 0
    %484 = vmatpush.bf16.msra.mxu0 0
    %485 = vmatpush.bf16.msra.mxu0 0
    %486 = vmatpush.bf16.msra.mxu0 %v439
    %487 = vmatpush.bf16.msra.mxu0 %v436
    %488 = vmatpush.bf16.msra.mxu0 %v433
    %489 = vmatpush.bf16.msra.mxu0 %v430
    %490 = vmatmul.bf16.gmra.mxu0 %v275
    %v491 = vpop.f32.mrf.mxu0
    %v492 = vadd.f32 0.0, %v491
    %v493 = vpop.f32.mrf.mxu0
    %v494 = vadd.f32 0.0, %v493
    %495 = vmatmul.bf16.gmra.mxu0 %v278
    %v496 = vpop.f32.mrf.mxu0
    %v497 = vadd.f32 0.0, %v496
    %v498 = vpop.f32.mrf.mxu0
    %v499 = vadd.f32 0.0, %v498
    %500 = vmatmul.bf16.gmra.mxu0 %v281
    %v501 = vpop.f32.mrf.mxu0
    %v502 = vadd.f32 0.0, %v501
    %v503 = vpop.f32.mrf.mxu0
    %v504 = vadd.f32 0.0, %v503
    %505 = vmatmul.bf16.gmra.mxu0 %v284
    %v506 = vpop.f32.mrf.mxu0
    %v507 = vadd.f32 0.0, %v506
    %v508 = vpop.f32.mrf.mxu0
    %v509 = vadd.f32 0.0, %v508
    %510 = vdwg.mxu0
    %511 = vmatpush.bf16.msra.mxu0 0
    %512 = vmatpush.bf16.msra.mxu0 0
    %513 = vmatpush.bf16.msra.mxu0 0
    %514 = vmatpush.bf16.msra.mxu0 0
    %515 = vmatpush.bf16.msra.mxu0 %v440
    %516 = vmatpush.bf16.msra.mxu0 %v437
    %517 = vmatpush.bf16.msra.mxu0 %v434
    %518 = vmatpush.bf16.msra.mxu0 %v431
    %519 = vmatmul.bf16.gmra.mxu0 %v275
    %v520 = vpop.f32.mrf.mxu0
    %v521 = vadd.f32 0.0, %v520
    %v522 = vpop.f32.mrf.mxu0
    %v523 = vadd.f32 0.0, %v522
    %524 = vmatmul.bf16.gmra.mxu0 %v278
    %v525 = vpop.f32.mrf.mxu0
    %v526 = vadd.f32 0.0, %v525
    %v527 = vpop.f32.mrf.mxu0
    %v528 = vadd.f32 0.0, %v527
    %529 = vmatmul.bf16.gmra.mxu0 %v281
    %v530 = vpop.f32.mrf.mxu0
    %v531 = vadd.f32 0.0, %v530
    %v532 = vpop.f32.mrf.mxu0
    %v533 = vadd.f32 0.0, %v532
    %534 = vmatmul.bf16.gmra.mxu0 %v284
    %v535 = vpop.f32.mrf.mxu0
    %v536 = vadd.f32 0.0, %v535
    %v537 = vpop.f32.mrf.mxu0
    %v538 = vadd.f32 0.0, %v537
    %539 = vdwg.mxu0
    %v540 = vld [vmem:[#allocation5] sm:$0xff]
    %v541 = vld [vmem:[#allocation5 + $0x8] sm:$0xf]
    %v542 = vld [vmem:[#allocation5 + $0xc] sm:$0xff]
    %v543 = vld [vmem:[#allocation5 + $0x14] sm:$0xf]
    %v544 = vld [vmem:[#allocation5 + $0x18] sm:$0xff]
    %v545 = vld [vmem:[#allocation5 + $0x20] sm:$0xf]
    %v546 = vld [vmem:[#allocation5 + $0x24] sm:$0xff]
    %v547 = vld [vmem:[#allocation5 + $0x2c] sm:$0xf]
    %v548 = vld [vmem:[#allocation5 + $0x30] sm:$0xff]
    %v549 = vld [vmem:[#allocation5 + $0x38] sm:$0xf]
    %v550 = vld [vmem:[#allocation5 + $0x3c] sm:$0xff]
    %v551 = vld [vmem:[#allocation5 + $0x44] sm:$0xf]
    %v552 = vld [vmem:[#allocation5 + $0x48] sm:$0xff]
    %v553 = vld [vmem:[#allocation5 + $0x50] sm:$0xf]
    %v554 = vld [vmem:[#allocation5 + $0x54] sm:$0xff]
    %v555 = vld [vmem:[#allocation5 + $0x5c] sm:$0xf]
    %v556 = vld [vmem:[#allocation5 + $0x60] sm:$0xff]
    %v557 = vld [vmem:[#allocation5 + $0x68] sm:$0xf]
    %v558 = vld [vmem:[#allocation5 + $0x6c] sm:$0xff]
    %v559 = vld [vmem:[#allocation5 + $0x74] sm:$0xf]
    %v560 = vld [vmem:[#allocation5 + $0x78] sm:$0xff]
    %v561 = vld [vmem:[#allocation5 + $0x80] sm:$0xf]
    %v562 = vld [vmem:[#allocation5 + $0x84] sm:$0xff]
    %v563 = vld [vmem:[#allocation5 + $0x8c] sm:$0xf]
    %v564 = vld [vmem:[#allocation5 + $0x90] sm:$0xff]
    %v565 = vld [vmem:[#allocation5 + $0x98] sm:$0xf]
    %v566 = vld [vmem:[#allocation5 + $0x9c] sm:$0xff]
    %v567 = vld [vmem:[#allocation5 + $0xa4] sm:$0xf]
    %v568 = vld [vmem:[#allocation5 + $0xa8] sm:$0xff]
    %v569 = vld [vmem:[#allocation5 + $0xb0] sm:$0xf]
    %v570 = vld [vmem:[#allocation5 + $0xb4] sm:$0xff]
    %v571 = vld [vmem:[#allocation5 + $0xbc] sm:$0xf]
    %v572 = vld [vmem:[%s6] sm:$0x1]
    %v574 = vperm.slane %v572, 0
    %v608 = vunpack.c.l.b16 %v540
    %v609 = vunpack.c.h.b16 %v540
    %v610 = vunpack.c.l.b16 %v541
    %v611 = vunpack.c.l.b16 %v542
    %v612 = vunpack.c.h.b16 %v542
    %v613 = vunpack.c.l.b16 %v543
    %v614 = vunpack.c.l.b16 %v544
    %v615 = vunpack.c.h.b16 %v544
    %v616 = vunpack.c.l.b16 %v545
    %v617 = vunpack.c.l.b16 %v546
    %v618 = vunpack.c.h.b16 %v546
    %v619 = vunpack.c.l.b16 %v547
    %v620 = vunpack.c.l.b16 %v548
    %v621 = vunpack.c.h.b16 %v548
    %v622 = vunpack.c.l.b16 %v549
    %v623 = vunpack.c.l.b16 %v550
    %v624 = vunpack.c.h.b16 %v550
    %v625 = vunpack.c.l.b16 %v551
    %v626 = vunpack.c.l.b16 %v552
    %v627 = vunpack.c.h.b16 %v552
    %v628 = vunpack.c.l.b16 %v553
    %v629 = vunpack.c.l.b16 %v554
    %v630 = vunpack.c.h.b16 %v554
    %v631 = vunpack.c.l.b16 %v555
    %v632 = vunpack.c.l.b16 %v556
    %v633 = vunpack.c.h.b16 %v556
    %v634 = vunpack.c.l.b16 %v557
    %v635 = vunpack.c.l.b16 %v558
    %v636 = vunpack.c.h.b16 %v558
    %v637 = vunpack.c.l.b16 %v559
    %v638 = vunpack.c.l.b16 %v560
    %v639 = vunpack.c.h.b16 %v560
    %v640 = vunpack.c.l.b16 %v561
    %v641 = vunpack.c.l.b16 %v562
    %v642 = vunpack.c.h.b16 %v562
    %v643 = vunpack.c.l.b16 %v563
    %v644 = vunpack.c.l.b16 %v564
    %v645 = vunpack.c.h.b16 %v564
    %v646 = vunpack.c.l.b16 %v565
    %v647 = vunpack.c.l.b16 %v566
    %v648 = vunpack.c.h.b16 %v566
    %v649 = vunpack.c.l.b16 %v567
    %v650 = vunpack.c.l.b16 %v568
    %v651 = vunpack.c.h.b16 %v568
    %v652 = vunpack.c.l.b16 %v569
    %v653 = vunpack.c.l.b16 %v570
    %v654 = vunpack.c.h.b16 %v570
    %v655 = vunpack.c.l.b16 %v571
    %v656 = vpack.c.b16 %v611, %v608
    %v657 = vpack.c.b16 %v612, %v609
    %v658 = vpack.c.b16 %v613, %v610
    %v659 = vpack.c.b16 %v617, %v614
    %v660 = vpack.c.b16 %v618, %v615
    %v661 = vpack.c.b16 %v619, %v616
    %v662 = vpack.c.b16 %v623, %v620
    %v663 = vpack.c.b16 %v624, %v621
    %v664 = vpack.c.b16 %v625, %v622
    %v665 = vpack.c.b16 %v629, %v626
    %v666 = vpack.c.b16 %v630, %v627
    %v667 = vpack.c.b16 %v631, %v628
    %v668 = vpack.c.b16 %v635, %v632
    %v669 = vpack.c.b16 %v636, %v633
    %v670 = vpack.c.b16 %v637, %v634
    %v671 = vpack.c.b16 %v641, %v638
    %v672 = vpack.c.b16 %v642, %v639
    %v673 = vpack.c.b16 %v643, %v640
    %v674 = vpack.c.b16 %v647, %v644
    %v675 = vpack.c.b16 %v648, %v645
    %v676 = vpack.c.b16 %v649, %v646
    %v677 = vpack.c.b16 %v653, %v650
    %v678 = vpack.c.b16 %v654, %v651
    %v679 = vpack.c.b16 %v655, %v652
    %704 = vmatpush.bf16.msra.mxu0 %v677
    %705 = vmatpush.bf16.msra.mxu0 %v674
    %706 = vmatpush.bf16.msra.mxu0 %v671
    %707 = vmatpush.bf16.msra.mxu0 %v668
    %708 = vmatpush.bf16.msra.mxu0 %v665
    %709 = vmatpush.bf16.msra.mxu0 %v662
    %710 = vmatpush.bf16.msra.mxu0 %v659
    %711 = vmatpush.bf16.msra.mxu0 %v656
    %712 = vmatmul.bf16.gmra.mxu0 0
    %v713 = vpop.f32.mrf.mxu0
    %v714 = vadd.f32 0.0, %v713
    %v715 = vpop.f32.mrf.mxu0
    %716 = vdwg.mxu0
    %717 = vmatpush.bf16.msra.mxu0 %v678
    %718 = vmatpush.bf16.msra.mxu0 %v675
    %719 = vmatpush.bf16.msra.mxu0 %v672
    %720 = vmatpush.bf16.msra.mxu0 %v669
    %721 = vmatpush.bf16.msra.mxu0 %v666
    %722 = vmatpush.bf16.msra.mxu0 %v663
    %723 = vmatpush.bf16.msra.mxu0 %v660
    %724 = vmatpush.bf16.msra.mxu0 %v657
    %725 = vmatmul.bf16.gmra.mxu0 0
    %v726 = vpop.f32.mrf.mxu0
    %v727 = vadd.f32 0.0, %v726
    %v728 = vpop.f32.mrf.mxu0
    %729 = vdwg.mxu0
    %730 = vmatpush.bf16.msra.mxu0 %v679
    %731 = vmatpush.bf16.msra.mxu0 %v676
    %732 = vmatpush.bf16.msra.mxu0 %v673
    %733 = vmatpush.bf16.msra.mxu0 %v670
    %734 = vmatpush.bf16.msra.mxu0 %v667
    %735 = vmatpush.bf16.msra.mxu0 %v664
    %736 = vmatpush.bf16.msra.mxu0 %v661
    %737 = vmatpush.bf16.msra.mxu0 %v658
    %738 = vmatmul.bf16.gmra.mxu0 0
    %v739 = vpop.f32.mrf.mxu0
    %v740 = vadd.f32 0.0, %v739
    %v741 = vpop.f32.mrf.mxu0
    %742 = vdwg.mxu0
    %v743 = vadd.f32 %v296, %v480
    %v744 = vadd.f32 %v325, %v509
    %v745 = vadd.f32 %v354, %v538
    %v746 = vadd.f32 %v743, %v714
    %v747 = vadd.f32 %v744, %v727
    %v748 = vxor.u32 %v746, 2147483648
    %v749 = vxor.u32 %v747, 2147483648
    %v750 = vmul.f32 %v748, 1.442695
    %v751 = vpow.pop %v750
    %v752 = vmul.f32 %v749, 1.442695
    %v753 = vpow.pop %v752
    %v754 = vadd.f32 %v751, 1.0
    %v755 = vadd.f32 %v753, 1.0
    %v756 = vrcp.pop %v754
    %v757 = vmul.f32 %v754, %v756
    %v758 = vsub.f32 1.0, %v757
    %v759 = vmul.f32 %v756, %v758
    %v760 = vadd.f32 %v756, %v759
    %vm761 = vweird.f32 %v754
    %vm762 = vweird.f32 %v756
    %vm763 = vmor %vm761, %vm762
    %v764 = vsel %vm763, %v756, %v760
    %v765 = vand.u32 2147483647, %v754
    %vm766 = vcmp.eq.f32.partialorder %v765, 8.507059e+37
    %v767 = vand.u32 %v754, 2147483648
    %v768 = vor.u32 1.1754944e-38, %v767
    %v769 = vsel %vm766, %v768, %v764
    %v770 = vmul.f32 1.0, %v769
    %v771 = vrcp.pop %v755
    %v772 = vmul.f32 %v755, %v771
    %v773 = vsub.f32 1.0, %v772
    %v774 = vmul.f32 %v771, %v773
    %v775 = vadd.f32 %v771, %v774
    %vm776 = vweird.f32 %v755
    %vm777 = vweird.f32 %v771
    %vm778 = vmor %vm776, %vm777
    %v779 = vsel %vm778, %v771, %v775
    %v780 = vand.u32 2147483647, %v755
    %vm781 = vcmp.eq.f32.partialorder %v780, 8.507059e+37
    %v782 = vand.u32 %v755, 2147483648
    %v783 = vor.u32 1.1754944e-38, %v782
    %v784 = vsel %vm781, %v783, %v779
    %v785 = vmul.f32 1.0, %v784
    %v786 = vadd.f32 %v740, %v574
    %v787 = vmul.f32 %v770, %v786
    %v788 = vadd.f32 %v745, %v787
    %v789 = vtanh.pop %v788
    %v790 = vsub.f32 1.0, %v785
    %v791 = vmul.f32 %v790, %v789
    %v792 = vmul.f32 %v785, 0.0
    %v793 = vadd.f32 %v791, %v792
    %v794 = vpack.c.bf16 %v793, %v793
    %795 = vmatpush.bf16.msra.mxu0 %v677
    %796 = vmatpush.bf16.msra.mxu0 %v674
    %797 = vmatpush.bf16.msra.mxu0 %v671
    %798 = vmatpush.bf16.msra.mxu0 %v668
    %799 = vmatpush.bf16.msra.mxu0 %v665
    %800 = vmatpush.bf16.msra.mxu0 %v662
    %801 = vmatpush.bf16.msra.mxu0 %v659
    %802 = vmatpush.bf16.msra.mxu0 %v656
    %803 = vmatmul.bf16.gmra.mxu0 %v794
    %v804 = vpop.f32.mrf.mxu0
    %v805 = vadd.f32 0.0, %v804
    %v806 = vpop.f32.mrf.mxu0
    %807 = vdwg.mxu0
    %808 = vmatpush.bf16.msra.mxu0 %v678
    %809 = vmatpush.bf16.msra.mxu0 %v675
    %810 = vmatpush.bf16.msra.mxu0 %v672
    %811 = vmatpush.bf16.msra.mxu0 %v669
    %812 = vmatpush.bf16.msra.mxu0 %v666
    %813 = vmatpush.bf16.msra.mxu0 %v663
    %814 = vmatpush.bf16.msra.mxu0 %v660
    %815 = vmatpush.bf16.msra.mxu0 %v657
    %816 = vmatmul.bf16.gmra.mxu0 %v794
    %v817 = vpop.f32.mrf.mxu0
    %v818 = vadd.f32 0.0, %v817
    %v819 = vpop.f32.mrf.mxu0
    %820 = vdwg.mxu0
    %821 = vmatpush.bf16.msra.mxu0 %v679
    %822 = vmatpush.bf16.msra.mxu0 %v676
    %823 = vmatpush.bf16.msra.mxu0 %v673
    %824 = vmatpush.bf16.msra.mxu0 %v670
    %825 = vmatpush.bf16.msra.mxu0 %v667
    %826 = vmatpush.bf16.msra.mxu0 %v664
    %827 = vmatpush.bf16.msra.mxu0 %v661
    %828 = vmatpush.bf16.msra.mxu0 %v658
    %829 = vmatmul.bf16.gmra.mxu0 %v794
    %v830 = vpop.f32.mrf.mxu0
    %v831 = vadd.f32 0.0, %v830
    %v832 = vpop.f32.mrf.mxu0
    %833 = vdwg.mxu0
    %v834 = vadd.f32 %v298, %v478
    %v835 = vadd.f32 %v327, %v507
    %v836 = vadd.f32 %v356, %v536
    %v837 = vadd.f32 %v834, %v805
    %v838 = vadd.f32 %v835, %v818
    %v839 = vxor.u32 %v837, 2147483648
    %v840 = vxor.u32 %v838, 2147483648
    %v841 = vmul.f32 %v839, 1.442695
    %v842 = vpow.pop %v841
    %v843 = vmul.f32 %v840, 1.442695
    %v844 = vpow.pop %v843
    %v845 = vadd.f32 %v842, 1.0
    %v846 = vadd.f32 %v844, 1.0
    %v847 = vrcp.pop %v845
    %v848 = vmul.f32 %v845, %v847
    %v849 = vsub.f32 1.0, %v848
    %v850 = vmul.f32 %v847, %v849
    %v851 = vadd.f32 %v847, %v850
    %vm852 = vweird.f32 %v845
    %vm853 = vweird.f32 %v847
    %vm854 = vmor %vm852, %vm853
    %v855 = vsel %vm854, %v847, %v851
    %v856 = vand.u32 2147483647, %v845
    %vm857 = vcmp.eq.f32.partialorder %v856, 8.507059e+37
    %v858 = vand.u32 %v845, 2147483648
    %v859 = vor.u32 1.1754944e-38, %v858
    %v860 = vsel %vm857, %v859, %v855
    %v861 = vmul.f32 1.0, %v860
    %v862 = vrcp.pop %v846
    %v863 = vmul.f32 %v846, %v862
    %v864 = vsub.f32 1.0, %v863
    %v865 = vmul.f32 %v862, %v864
    %v866 = vadd.f32 %v862, %v865
    %vm867 = vweird.f32 %v846
    %vm868 = vweird.f32 %v862
    %vm869 = vmor %vm867, %vm868
    %v870 = vsel %vm869, %v862, %v866
    %v871 = vand.u32 2147483647, %v846
    %vm872 = vcmp.eq.f32.partialorder %v871, 8.507059e+37
    %v873 = vand.u32 %v846, 2147483648
    %v874 = vor.u32 1.1754944e-38, %v873
    %v875 = vsel %vm872, %v874, %v870
    %v876 = vmul.f32 1.0, %v875
    %v877 = vadd.f32 %v831, %v574
    %v878 = vmul.f32 %v861, %v877
    %v879 = vadd.f32 %v836, %v878
    %v880 = vtanh.pop %v879
    %v881 = vsub.f32 1.0, %v876
    %v882 = vmul.f32 %v881, %v880
    %v883 = vmul.f32 %v876, %v793
    %v884 = vadd.f32 %v882, %v883
    %v885 = vpack.c.bf16 %v884, %v884
    %886 = vmatpush.bf16.msra.mxu0 %v677
    %887 = vmatpush.bf16.msra.mxu0 %v674
    %888 = vmatpush.bf16.msra.mxu0 %v671
    %889 = vmatpush.bf16.msra.mxu0 %v668
    %890 = vmatpush.bf16.msra.mxu0 %v665
    %891 = vmatpush.bf16.msra.mxu0 %v662
    %892 = vmatpush.bf16.msra.mxu0 %v659
    %893 = vmatpush.bf16.msra.mxu0 %v656
    %894 = vmatmul.bf16.gmra.mxu0 %v885
    %v895 = vpop.f32.mrf.mxu0
    %v896 = vadd.f32 0.0, %v895
    %v897 = vpop.f32.mrf.mxu0
    %898 = vdwg.mxu0
    %899 = vmatpush.bf16.msra.mxu0 %v678
    %900 = vmatpush.bf16.msra.mxu0 %v675
    %901 = vmatpush.bf16.msra.mxu0 %v672
    %902 = vmatpush.bf16.msra.mxu0 %v669
    %903 = vmatpush.bf16.msra.mxu0 %v666
    %904 = vmatpush.bf16.msra.mxu0 %v663
    %905 = vmatpush.bf16.msra.mxu0 %v660
    %906 = vmatpush.bf16.msra.mxu0 %v657
    %907 = vmatmul.bf16.gmra.mxu0 %v885
    %v908 = vpop.f32.mrf.mxu0
    %v909 = vadd.f32 0.0, %v908
    %v910 = vpop.f32.mrf.mxu0
    %911 = vdwg.mxu0
    %912 = vmatpush.bf16.msra.mxu0 %v679
    %913 = vmatpush.bf16.msra.mxu0 %v676
    %914 = vmatpush.bf16.msra.mxu0 %v673
    %915 = vmatpush.bf16.msra.mxu0 %v670
    %916 = vmatpush.bf16.msra.mxu0 %v667
    %917 = vmatpush.bf16.msra.mxu0 %v664
    %918 = vmatpush.bf16.msra.mxu0 %v661
    %919 = vmatpush.bf16.msra.mxu0 %v658
    %920 = vmatmul.bf16.gmra.mxu0 %v885
    %v921 = vpop.f32.mrf.mxu0
    %v922 = vadd.f32 0.0, %v921
    %v923 = vpop.f32.mrf.mxu0
    %924 = vdwg.mxu0
    %v925 = vadd.f32 %v301, %v475
    %v926 = vadd.f32 %v330, %v504
    %v927 = vadd.f32 %v359, %v533
    %v928 = vadd.f32 %v925, %v896
    %v929 = vadd.f32 %v926, %v909
    %v930 = vxor.u32 %v928, 2147483648
    %v931 = vxor.u32 %v929, 2147483648
    %v932 = vmul.f32 %v930, 1.442695
    %v933 = vpow.pop %v932
    %v934 = vmul.f32 %v931, 1.442695
    %v935 = vpow.pop %v934
    %v936 = vadd.f32 %v933, 1.0
    %v937 = vadd.f32 %v935, 1.0
    %v938 = vrcp.pop %v936
    %v939 = vmul.f32 %v936, %v938
    %v940 = vsub.f32 1.0, %v939
    %v941 = vmul.f32 %v938, %v940
    %v942 = vadd.f32 %v938, %v941
    %vm943 = vweird.f32 %v936
    %vm944 = vweird.f32 %v938
    %vm945 = vmor %vm943, %vm944
    %v946 = vsel %vm945, %v938, %v942
    %v947 = vand.u32 2147483647, %v936
    %vm948 = vcmp.eq.f32.partialorder %v947, 8.507059e+37
    %v949 = vand.u32 %v936, 2147483648
    %v950 = vor.u32 1.1754944e-38, %v949
    %v951 = vsel %vm948, %v950, %v946
    %v952 = vmul.f32 1.0, %v951
    %v953 = vrcp.pop %v937
    %v954 = vmul.f32 %v937, %v953
    %v955 = vsub.f32 1.0, %v954
    %v956 = vmul.f32 %v953, %v955
    %v957 = vadd.f32 %v953, %v956
    %vm958 = vweird.f32 %v937
    %vm959 = vweird.f32 %v953
    %vm960 = vmor %vm958, %vm959
    %v961 = vsel %vm960, %v953, %v957
    %v962 = vand.u32 2147483647, %v937
    %vm963 = vcmp.eq.f32.partialorder %v962, 8.507059e+37
    %v964 = vand.u32 %v937, 2147483648
    %v965 = vor.u32 1.1754944e-38, %v964
    %v966 = vsel %vm963, %v965, %v961
    %v967 = vmul.f32 1.0, %v966
    %v968 = vadd.f32 %v922, %v574
    %v969 = vmul.f32 %v952, %v968
    %v970 = vadd.f32 %v927, %v969
    %v971 = vtanh.pop %v970
    %v972 = vsub.f32 1.0, %v967
    %v973 = vmul.f32 %v972, %v971
    %v974 = vmul.f32 %v967, %v884
    %v975 = vadd.f32 %v973, %v974
    %v976 = vpack.c.bf16 %v975, %v975
    %977 = vmatpush.bf16.msra.mxu0 %v677
    %978 = vmatpush.bf16.msra.mxu0 %v674
    %979 = vmatpush.bf16.msra.mxu0 %v671
    %980 = vmatpush.bf16.msra.mxu0 %v668
    %981 = vmatpush.bf16.msra.mxu0 %v665
    %982 = vmatpush.bf16.msra.mxu0 %v662
    %983 = vmatpush.bf16.msra.mxu0 %v659
    %984 = vmatpush.bf16.msra.mxu0 %v656
    %985 = vmatmul.bf16.gmra.mxu0 %v976
    %v986 = vpop.f32.mrf.mxu0
    %v987 = vadd.f32 0.0, %v986
    %v988 = vpop.f32.mrf.mxu0
    %989 = vdwg.mxu0
    %990 = vmatpush.bf16.msra.mxu0 %v678
    %991 = vmatpush.bf16.msra.mxu0 %v675
    %992 = vmatpush.bf16.msra.mxu0 %v672
    %993 = vmatpush.bf16.msra.mxu0 %v669
    %994 = vmatpush.bf16.msra.mxu0 %v666
    %995 = vmatpush.bf16.msra.mxu0 %v663
    %996 = vmatpush.bf16.msra.mxu0 %v660
    %997 = vmatpush.bf16.msra.mxu0 %v657
    %998 = vmatmul.bf16.gmra.mxu0 %v976
    %v999 = vpop.f32.mrf.mxu0
    %v1000 = vadd.f32 0.0, %v999
    %v1001 = vpop.f32.mrf.mxu0
    %1002 = vdwg.mxu0
    %1003 = vmatpush.bf16.msra.mxu0 %v679
    %1004 = vmatpush.bf16.msra.mxu0 %v676
    %1005 = vmatpush.bf16.msra.mxu0 %v673
    %1006 = vmatpush.bf16.msra.mxu0 %v670
    %1007 = vmatpush.bf16.msra.mxu0 %v667
    %1008 = vmatpush.bf16.msra.mxu0 %v664
    %1009 = vmatpush.bf16.msra.mxu0 %v661
    %1010 = vmatpush.bf16.msra.mxu0 %v658
    %1011 = vmatmul.bf16.gmra.mxu0 %v976
    %v1012 = vpop.f32.mrf.mxu0
    %v1013 = vadd.f32 0.0, %v1012
    %v1014 = vpop.f32.mrf.mxu0
    %1015 = vdwg.mxu0
    %v1016 = vadd.f32 %v303, %v473
    %v1017 = vadd.f32 %v332, %v502
    %v1018 = vadd.f32 %v361, %v531
    %v1019 = vadd.f32 %v1016, %v987
    %v1020 = vadd.f32 %v1017, %v1000
    %v1021 = vxor.u32 %v1019, 2147483648
    %v1022 = vxor.u32 %v1020, 2147483648
    %v1023 = vmul.f32 %v1021, 1.442695
    %v1024 = vpow.pop %v1023
    %v1025 = vmul.f32 %v1022, 1.442695
    %v1026 = vpow.pop %v1025
    %v1027 = vadd.f32 %v1024, 1.0
    %v1028 = vadd.f32 %v1026, 1.0
    %v1029 = vrcp.pop %v1027
    %v1030 = vmul.f32 %v1027, %v1029
    %v1031 = vsub.f32 1.0, %v1030
    %v1032 = vmul.f32 %v1029, %v1031
    %v1033 = vadd.f32 %v1029, %v1032
    %vm1034 = vweird.f32 %v1027
    %vm1035 = vweird.f32 %v1029
    %vm1036 = vmor %vm1034, %vm1035
    %v1037 = vsel %vm1036, %v1029, %v1033
    %v1038 = vand.u32 2147483647, %v1027
    %vm1039 = vcmp.eq.f32.partialorder %v1038, 8.507059e+37
    %v1040 = vand.u32 %v1027, 2147483648
    %v1041 = vor.u32 1.1754944e-38, %v1040
    %v1042 = vsel %vm1039, %v1041, %v1037
    %v1043 = vmul.f32 1.0, %v1042
    %v1044 = vrcp.pop %v1028
    %v1045 = vmul.f32 %v1028, %v1044
    %v1046 = vsub.f32 1.0, %v1045
    %v1047 = vmul.f32 %v1044, %v1046
    %v1048 = vadd.f32 %v1044, %v1047
    %vm1049 = vweird.f32 %v1028
    %vm1050 = vweird.f32 %v1044
    %vm1051 = vmor %vm1049, %vm1050
    %v1052 = vsel %vm1051, %v1044, %v1048
    %v1053 = vand.u32 2147483647, %v1028
    %vm1054 = vcmp.eq.f32.partialorder %v1053, 8.507059e+37
    %v1055 = vand.u32 %v1028, 2147483648
    %v1056 = vor.u32 1.1754944e-38, %v1055
    %v1057 = vsel %vm1054, %v1056, %v1052
    %v1058 = vmul.f32 1.0, %v1057
    %v1059 = vadd.f32 %v1013, %v574
    %v1060 = vmul.f32 %v1043, %v1059
    %v1061 = vadd.f32 %v1018, %v1060
    %v1062 = vtanh.pop %v1061
    %v1063 = vsub.f32 1.0, %v1058
    %v1064 = vmul.f32 %v1063, %v1062
    %v1065 = vmul.f32 %v1058, %v975
    %v1066 = vadd.f32 %v1064, %v1065
    %v1067 = vpack.c.bf16 %v1066, %v1066
    %1068 = vmatpush.bf16.msra.mxu0 %v677
    %1069 = vmatpush.bf16.msra.mxu0 %v674
    %1070 = vmatpush.bf16.msra.mxu0 %v671
    %1071 = vmatpush.bf16.msra.mxu0 %v668
    %1072 = vmatpush.bf16.msra.mxu0 %v665
    %1073 = vmatpush.bf16.msra.mxu0 %v662
    %1074 = vmatpush.bf16.msra.mxu0 %v659
    %1075 = vmatpush.bf16.msra.mxu0 %v656
    %1076 = vmatmul.bf16.gmra.mxu0 %v1067
    %v1077 = vpop.f32.mrf.mxu0
    %v1078 = vadd.f32 0.0, %v1077
    %v1079 = vpop.f32.mrf.mxu0
    %1080 = vdwg.mxu0
    %1081 = vmatpush.bf16.msra.mxu0 %v678
    %1082 = vmatpush.bf16.msra.mxu0 %v675
    %1083 = vmatpush.bf16.msra.mxu0 %v672
    %1084 = vmatpush.bf16.msra.mxu0 %v669
    %1085 = vmatpush.bf16.msra.mxu0 %v666
    %1086 = vmatpush.bf16.msra.mxu0 %v663
    %1087 = vmatpush.bf16.msra.mxu0 %v660
    %1088 = vmatpush.bf16.msra.mxu0 %v657
    %1089 = vmatmul.bf16.gmra.mxu0 %v1067
    %v1090 = vpop.f32.mrf.mxu0
    %v1091 = vadd.f32 0.0, %v1090
    %v1092 = vpop.f32.mrf.mxu0
    %1093 = vdwg.mxu0
    %1094 = vmatpush.bf16.msra.mxu0 %v679
    %1095 = vmatpush.bf16.msra.mxu0 %v676
    %1096 = vmatpush.bf16.msra.mxu0 %v673
    %1097 = vmatpush.bf16.msra.mxu0 %v670
    %1098 = vmatpush.bf16.msra.mxu0 %v667
    %1099 = vmatpush.bf16.msra.mxu0 %v664
    %1100 = vmatpush.bf16.msra.mxu0 %v661
    %1101 = vmatpush.bf16.msra.mxu0 %v658
    %1102 = vmatmul.bf16.gmra.mxu0 %v1067
    %v1103 = vpop.f32.mrf.mxu0
    %v1104 = vadd.f32 0.0, %v1103
    %v1105 = vpop.f32.mrf.mxu0
    %1106 = vdwg.mxu0
    %v1107 = vadd.f32 %v306, %v470
    %v1108 = vadd.f32 %v335, %v499
    %v1109 = vadd.f32 %v364, %v528
    %v1110 = vadd.f32 %v1107, %v1078
    %v1111 = vadd.f32 %v1108, %v1091
    %v1112 = vxor.u32 %v1110, 2147483648
    %v1113 = vxor.u32 %v1111, 2147483648
    %v1114 = vmul.f32 %v1112, 1.442695
    %v1115 = vpow.pop %v1114
    %v1116 = vmul.f32 %v1113, 1.442695
    %v1117 = vpow.pop %v1116
    %v1118 = vadd.f32 %v1115, 1.0
    %v1119 = vadd.f32 %v1117, 1.0
    %v1120 = vrcp.pop %v1118
    %v1121 = vmul.f32 %v1118, %v1120
    %v1122 = vsub.f32 1.0, %v1121
    %v1123 = vmul.f32 %v1120, %v1122
    %v1124 = vadd.f32 %v1120, %v1123
    %vm1125 = vweird.f32 %v1118
    %vm1126 = vweird.f32 %v1120
    %vm1127 = vmor %vm1125, %vm1126
    %v1128 = vsel %vm1127, %v1120, %v1124
    %v1129 = vand.u32 2147483647, %v1118
    %vm1130 = vcmp.eq.f32.partialorder %v1129, 8.507059e+37
    %v1131 = vand.u32 %v1118, 2147483648
    %v1132 = vor.u32 1.1754944e-38, %v1131
    %v1133 = vsel %vm1130, %v1132, %v1128
    %v1134 = vmul.f32 1.0, %v1133
    %v1135 = vrcp.pop %v1119
    %v1136 = vmul.f32 %v1119, %v1135
    %v1137 = vsub.f32 1.0, %v1136
    %v1138 = vmul.f32 %v1135, %v1137
    %v1139 = vadd.f32 %v1135, %v1138
    %vm1140 = vweird.f32 %v1119
    %vm1141 = vweird.f32 %v1135
    %vm1142 = vmor %vm1140, %vm1141
    %v1143 = vsel %vm1142, %v1135, %v1139
    %v1144 = vand.u32 2147483647, %v1119
    %vm1145 = vcmp.eq.f32.partialorder %v1144, 8.507059e+37
    %v1146 = vand.u32 %v1119, 2147483648
    %v1147 = vor.u32 1.1754944e-38, %v1146
    %v1148 = vsel %vm1145, %v1147, %v1143
    %v1149 = vmul.f32 1.0, %v1148
    %v1150 = vadd.f32 %v1104, %v574
    %v1151 = vmul.f32 %v1134, %v1150
    %v1152 = vadd.f32 %v1109, %v1151
    %v1153 = vtanh.pop %v1152
    %v1154 = vsub.f32 1.0, %v1149
    %v1155 = vmul.f32 %v1154, %v1153
    %v1156 = vmul.f32 %v1149, %v1066
    %v1157 = vadd.f32 %v1155, %v1156
    %v1158 = vpack.c.bf16 %v1157, %v1157
    %1159 = vmatpush.bf16.msra.mxu0 %v677
    %1160 = vmatpush.bf16.msra.mxu0 %v674
    %1161 = vmatpush.bf16.msra.mxu0 %v671
    %1162 = vmatpush.bf16.msra.mxu0 %v668
    %1163 = vmatpush.bf16.msra.mxu0 %v665
    %1164 = vmatpush.bf16.msra.mxu0 %v662
    %1165 = vmatpush.bf16.msra.mxu0 %v659
    %1166 = vmatpush.bf16.msra.mxu0 %v656
    %1167 = vmatmul.bf16.gmra.mxu0 %v1158
    %v1168 = vpop.f32.mrf.mxu0
    %v1169 = vadd.f32 0.0, %v1168
    %v1170 = vpop.f32.mrf.mxu0
    %1171 = vdwg.mxu0
    %1172 = vmatpush.bf16.msra.mxu0 %v678
    %1173 = vmatpush.bf16.msra.mxu0 %v675
    %1174 = vmatpush.bf16.msra.mxu0 %v672
    %1175 = vmatpush.bf16.msra.mxu0 %v669
    %1176 = vmatpush.bf16.msra.mxu0 %v666
    %1177 = vmatpush.bf16.msra.mxu0 %v663
    %1178 = vmatpush.bf16.msra.mxu0 %v660
    %1179 = vmatpush.bf16.msra.mxu0 %v657
    %1180 = vmatmul.bf16.gmra.mxu0 %v1158
    %v1181 = vpop.f32.mrf.mxu0
    %v1182 = vadd.f32 0.0, %v1181
    %v1183 = vpop.f32.mrf.mxu0
    %1184 = vdwg.mxu0
    %1185 = vmatpush.bf16.msra.mxu0 %v679
    %1186 = vmatpush.bf16.msra.mxu0 %v676
    %1187 = vmatpush.bf16.msra.mxu0 %v673
    %1188 = vmatpush.bf16.msra.mxu0 %v670
    %1189 = vmatpush.bf16.msra.mxu0 %v667
    %1190 = vmatpush.bf16.msra.mxu0 %v664
    %1191 = vmatpush.bf16.msra.mxu0 %v661
    %1192 = vmatpush.bf16.msra.mxu0 %v658
    %1193 = vmatmul.bf16.gmra.mxu0 %v1158
    %v1194 = vpop.f32.mrf.mxu0
    %v1195 = vadd.f32 0.0, %v1194
    %v1196 = vpop.f32.mrf.mxu0
    %1197 = vdwg.mxu0
    %v1198 = vadd.f32 %v308, %v468
    %v1199 = vadd.f32 %v337, %v497
    %v1200 = vadd.f32 %v366, %v526
    %v1201 = vadd.f32 %v1198, %v1169
    %v1202 = vadd.f32 %v1199, %v1182
    %v1203 = vxor.u32 %v1201, 2147483648
    %v1204 = vxor.u32 %v1202, 2147483648
    %v1205 = vmul.f32 %v1203, 1.442695
    %v1206 = vpow.pop %v1205
    %v1207 = vmul.f32 %v1204, 1.442695
    %v1208 = vpow.pop %v1207
    %v1209 = vadd.f32 %v1206, 1.0
    %v1210 = vadd.f32 %v1208, 1.0
    %v1211 = vrcp.pop %v1209
    %v1212 = vmul.f32 %v1209, %v1211
    %v1213 = vsub.f32 1.0, %v1212
    %v1214 = vmul.f32 %v1211, %v1213
    %v1215 = vadd.f32 %v1211, %v1214
    %vm1216 = vweird.f32 %v1209
    %vm1217 = vweird.f32 %v1211
    %vm1218 = vmor %vm1216, %vm1217
    %v1219 = vsel %vm1218, %v1211, %v1215
    %v1220 = vand.u32 2147483647, %v1209
    %vm1221 = vcmp.eq.f32.partialorder %v1220, 8.507059e+37
    %v1222 = vand.u32 %v1209, 2147483648
    %v1223 = vor.u32 1.1754944e-38, %v1222
    %v1224 = vsel %vm1221, %v1223, %v1219
    %v1225 = vmul.f32 1.0, %v1224
    %v1226 = vrcp.pop %v1210
    %v1227 = vmul.f32 %v1210, %v1226
    %v1228 = vsub.f32 1.0, %v1227
    %v1229 = vmul.f32 %v1226, %v1228
    %v1230 = vadd.f32 %v1226, %v1229
    %vm1231 = vweird.f32 %v1210
    %vm1232 = vweird.f32 %v1226
    %vm1233 = vmor %vm1231, %vm1232
    %v1234 = vsel %vm1233, %v1226, %v1230
    %v1235 = vand.u32 2147483647, %v1210
    %vm1236 = vcmp.eq.f32.partialorder %v1235, 8.507059e+37
    %v1237 = vand.u32 %v1210, 2147483648
    %v1238 = vor.u32 1.1754944e-38, %v1237
    %v1239 = vsel %vm1236, %v1238, %v1234
    %v1240 = vmul.f32 1.0, %v1239
    %v1241 = vadd.f32 %v1195, %v574
    %v1242 = vmul.f32 %v1225, %v1241
    %v1243 = vadd.f32 %v1200, %v1242
    %v1244 = vtanh.pop %v1243
    %v1245 = vsub.f32 1.0, %v1240
    %v1246 = vmul.f32 %v1245, %v1244
    %v1247 = vmul.f32 %v1240, %v1157
    %v1248 = vadd.f32 %v1246, %v1247
    %v1249 = vpack.c.bf16 %v1248, %v1248
    %1250 = vmatpush.bf16.msra.mxu0 %v677
    %1251 = vmatpush.bf16.msra.mxu0 %v674
    %1252 = vmatpush.bf16.msra.mxu0 %v671
    %1253 = vmatpush.bf16.msra.mxu0 %v668
    %1254 = vmatpush.bf16.msra.mxu0 %v665
    %1255 = vmatpush.bf16.msra.mxu0 %v662
    %1256 = vmatpush.bf16.msra.mxu0 %v659
    %1257 = vmatpush.bf16.msra.mxu0 %v656
    %1258 = vmatmul.bf16.gmra.mxu0 %v1249
    %v1259 = vpop.f32.mrf.mxu0
    %v1260 = vadd.f32 0.0, %v1259
    %v1261 = vpop.f32.mrf.mxu0
    %1262 = vdwg.mxu0
    %1263 = vmatpush.bf16.msra.mxu0 %v678
    %1264 = vmatpush.bf16.msra.mxu0 %v675
    %1265 = vmatpush.bf16.msra.mxu0 %v672
    %1266 = vmatpush.bf16.msra.mxu0 %v669
    %1267 = vmatpush.bf16.msra.mxu0 %v666
    %1268 = vmatpush.bf16.msra.mxu0 %v663
    %1269 = vmatpush.bf16.msra.mxu0 %v660
    %1270 = vmatpush.bf16.msra.mxu0 %v657
    %1271 = vmatmul.bf16.gmra.mxu0 %v1249
    %v1272 = vpop.f32.mrf.mxu0
    %v1273 = vadd.f32 0.0, %v1272
    %v1274 = vpop.f32.mrf.mxu0
    %1275 = vdwg.mxu0
    %1276 = vmatpush.bf16.msra.mxu0 %v679
    %1277 = vmatpush.bf16.msra.mxu0 %v676
    %1278 = vmatpush.bf16.msra.mxu0 %v673
    %1279 = vmatpush.bf16.msra.mxu0 %v670
    %1280 = vmatpush.bf16.msra.mxu0 %v667
    %1281 = vmatpush.bf16.msra.mxu0 %v664
    %1282 = vmatpush.bf16.msra.mxu0 %v661
    %1283 = vmatpush.bf16.msra.mxu0 %v658
    %1284 = vmatmul.bf16.gmra.mxu0 %v1249
    %v1285 = vpop.f32.mrf.mxu0
    %v1286 = vadd.f32 0.0, %v1285
    %v1287 = vpop.f32.mrf.mxu0
    %1288 = vdwg.mxu0
    %v1289 = vadd.f32 %v311, %v465
    %v1290 = vadd.f32 %v340, %v494
    %v1291 = vadd.f32 %v369, %v523
    %v1292 = vadd.f32 %v1289, %v1260
    %v1293 = vadd.f32 %v1290, %v1273
    %v1294 = vxor.u32 %v1292, 2147483648
    %v1295 = vxor.u32 %v1293, 2147483648
    %v1296 = vmul.f32 %v1294, 1.442695
    %v1297 = vpow.pop %v1296
    %v1298 = vmul.f32 %v1295, 1.442695
    %v1299 = vpow.pop %v1298
    %v1300 = vadd.f32 %v1297, 1.0
    %v1301 = vadd.f32 %v1299, 1.0
    %v1302 = vrcp.pop %v1300
    %v1303 = vmul.f32 %v1300, %v1302
    %v1304 = vsub.f32 1.0, %v1303
    %v1305 = vmul.f32 %v1302, %v1304
    %v1306 = vadd.f32 %v1302, %v1305
    %vm1307 = vweird.f32 %v1300
    %vm1308 = vweird.f32 %v1302
    %vm1309 = vmor %vm1307, %vm1308
    %v1310 = vsel %vm1309, %v1302, %v1306
    %v1311 = vand.u32 2147483647, %v1300
    %vm1312 = vcmp.eq.f32.partialorder %v1311, 8.507059e+37
    %v1313 = vand.u32 %v1300, 2147483648
    %v1314 = vor.u32 1.1754944e-38, %v1313
    %v1315 = vsel %vm1312, %v1314, %v1310
    %v1316 = vmul.f32 1.0, %v1315
    %v1317 = vrcp.pop %v1301
    %v1318 = vmul.f32 %v1301, %v1317
    %v1319 = vsub.f32 1.0, %v1318
    %v1320 = vmul.f32 %v1317, %v1319
    %v1321 = vadd.f32 %v1317, %v1320
    %vm1322 = vweird.f32 %v1301
    %vm1323 = vweird.f32 %v1317
    %vm1324 = vmor %vm1322, %vm1323
    %v1325 = vsel %vm1324, %v1317, %v1321
    %v1326 = vand.u32 2147483647, %v1301
    %vm1327 = vcmp.eq.f32.partialorder %v1326, 8.507059e+37
    %v1328 = vand.u32 %v1301, 2147483648
    %v1329 = vor.u32 1.1754944e-38, %v1328
    %v1330 = vsel %vm1327, %v1329, %v1325
    %v1331 = vmul.f32 1.0, %v1330
    %v1332 = vadd.f32 %v1286, %v574
    %v1333 = vmul.f32 %v1316, %v1332
    %v1334 = vadd.f32 %v1291, %v1333
    %v1335 = vtanh.pop %v1334
    %v1336 = vsub.f32 1.0, %v1331
    %v1337 = vmul.f32 %v1336, %v1335
    %v1338 = vmul.f32 %v1331, %v1248
    %v1339 = vadd.f32 %v1337, %v1338
    %v1340 = vpack.c.bf16 %v1339, %v1339
    %1341 = vmatpush.bf16.msra.mxu0 %v677
    %1342 = vmatpush.bf16.msra.mxu0 %v674
    %1343 = vmatpush.bf16.msra.mxu0 %v671
    %1344 = vmatpush.bf16.msra.mxu0 %v668
    %1345 = vmatpush.bf16.msra.mxu0 %v665
    %1346 = vmatpush.bf16.msra.mxu0 %v662
    %1347 = vmatpush.bf16.msra.mxu0 %v659
    %1348 = vmatpush.bf16.msra.mxu0 %v656
    %1349 = vmatmul.bf16.gmra.mxu0 %v1340
    %v1350 = vpop.f32.mrf.mxu0
    %v1351 = vadd.f32 0.0, %v1350
    %v1352 = vpop.f32.mrf.mxu0
    %1353 = vdwg.mxu0
    %1354 = vmatpush.bf16.msra.mxu0 %v678
    %1355 = vmatpush.bf16.msra.mxu0 %v675
    %1356 = vmatpush.bf16.msra.mxu0 %v672
    %1357 = vmatpush.bf16.msra.mxu0 %v669
    %1358 = vmatpush.bf16.msra.mxu0 %v666
    %1359 = vmatpush.bf16.msra.mxu0 %v663
    %1360 = vmatpush.bf16.msra.mxu0 %v660
    %1361 = vmatpush.bf16.msra.mxu0 %v657
    %1362 = vmatmul.bf16.gmra.mxu0 %v1340
    %v1363 = vpop.f32.mrf.mxu0
    %v1364 = vadd.f32 0.0, %v1363
    %v1365 = vpop.f32.mrf.mxu0
    %1366 = vdwg.mxu0
    %1367 = vmatpush.bf16.msra.mxu0 %v679
    %1368 = vmatpush.bf16.msra.mxu0 %v676
    %1369 = vmatpush.bf16.msra.mxu0 %v673
    %1370 = vmatpush.bf16.msra.mxu0 %v670
    %1371 = vmatpush.bf16.msra.mxu0 %v667
    %1372 = vmatpush.bf16.msra.mxu0 %v664
    %1373 = vmatpush.bf16.msra.mxu0 %v661
    %1374 = vmatpush.bf16.msra.mxu0 %v658
    %1375 = vmatmul.bf16.gmra.mxu0 %v1340
    %v1376 = vpop.f32.mrf.mxu0
    %v1377 = vadd.f32 0.0, %v1376
    %v1378 = vpop.f32.mrf.mxu0
    %1379 = vdwg.mxu0
    %v1380 = vadd.f32 %v313, %v463
    %v1381 = vadd.f32 %v342, %v492
    %v1382 = vadd.f32 %v371, %v521
    %v1383 = vadd.f32 %v1380, %v1351
    %v1384 = vadd.f32 %v1381, %v1364
    %v1385 = vxor.u32 %v1383, 2147483648
    %v1386 = vxor.u32 %v1384, 2147483648
    %v1387 = vmul.f32 %v1385, 1.442695
    %v1388 = vpow.pop %v1387
    %v1389 = vmul.f32 %v1386, 1.442695
    %v1390 = vpow.pop %v1389
    %v1391 = vadd.f32 %v1388, 1.0
    %v1392 = vadd.f32 %v1390, 1.0
    %v1393 = vrcp.pop %v1391
    %v1394 = vmul.f32 %v1391, %v1393
    %v1395 = vsub.f32 1.0, %v1394
    %v1396 = vmul.f32 %v1393, %v1395
    %v1397 = vadd.f32 %v1393, %v1396
    %vm1398 = vweird.f32 %v1391
    %vm1399 = vweird.f32 %v1393
    %vm1400 = vmor %vm1398, %vm1399
    %v1401 = vsel %vm1400, %v1393, %v1397
    %v1402 = vand.u32 2147483647, %v1391
    %vm1403 = vcmp.eq.f32.partialorder %v1402, 8.507059e+37
    %v1404 = vand.u32 %v1391, 2147483648
    %v1405 = vor.u32 1.1754944e-38, %v1404
    %v1406 = vsel %vm1403, %v1405, %v1401
    %v1407 = vmul.f32 1.0, %v1406
    %v1408 = vrcp.pop %v1392
    %v1409 = vmul.f32 %v1392, %v1408
    %v1410 = vsub.f32 1.0, %v1409
    %v1411 = vmul.f32 %v1408, %v1410
    %v1412 = vadd.f32 %v1408, %v1411
    %vm1413 = vweird.f32 %v1392
    %vm1414 = vweird.f32 %v1408
    %vm1415 = vmor %vm1413, %vm1414
    %v1416 = vsel %vm1415, %v1408, %v1412
    %v1417 = vand.u32 2147483647, %v1392
    %vm1418 = vcmp.eq.f32.partialorder %v1417, 8.507059e+37
    %v1419 = vand.u32 %v1392, 2147483648
    %v1420 = vor.u32 1.1754944e-38, %v1419
    %v1421 = vsel %vm1418, %v1420, %v1416
    %v1422 = vmul.f32 1.0, %v1421
    %v1423 = vadd.f32 %v1377, %v574
    %v1424 = vmul.f32 %v1407, %v1423
    %v1425 = vadd.f32 %v1382, %v1424
    %v1426 = vtanh.pop %v1425
    %v1427 = vsub.f32 1.0, %v1422
    %v1428 = vmul.f32 %v1427, %v1426
    %v1429 = vmul.f32 %v1422, %v1339
    %v1430 = vadd.f32 %v1428, %v1429
    %v1431 = vsel %vm273, %v793, %v1430
    %v1432 = vsel %vm273, %v884, %v1339
    %v1433 = vsel %vm273, %v975, %v1248
    %v1434 = vsel %vm273, %v1066, %v1157
    %v1435 = vsel %vm273, %v1157, %v1066
    %v1436 = vsel %vm273, %v1248, %v975
    %v1437 = vsel %vm273, %v1339, %v884
    %v1438 = vsel %vm273, %v1430, %v793
    %1439 = vst [vmem:[#allocation7] sm:$0xff] %v1431
    %1440 = vst [vmem:[#allocation7 + $0x8] sm:$0xff] %v1432
    %1441 = vst [vmem:[#allocation7 + $0x10] sm:$0xff] %v1433
    %1442 = vst [vmem:[#allocation7 + $0x18] sm:$0xff] %v1434
    %1443 = vst [vmem:[#allocation7 + $0x20] sm:$0xff] %v1435
    %1444 = vst [vmem:[#allocation7 + $0x28] sm:$0xff] %v1436
    %1445 = vst [vmem:[#allocation7 + $0x30] sm:$0xff] %v1437
    %1446 = vst [vmem:[#allocation7 + $0x38] sm:$0xff] %v1438
    %v1447 = vpack.c.bf16 %v1430, %v1430
    %v1448 = vld [vmem:[%s7] sm:$0xf]
    %v1449 = vld [vmem:[%s7 + $0x4] sm:$0xf]
    %v1450 = vld [vmem:[%s7 + $0x8] sm:$0xf]
    %v1451 = vld [vmem:[%s7 + $0xc] sm:$0xf]
    %v1452 = vld [vmem:[%s7 + $0x10] sm:$0xf]
    %v1453 = vld [vmem:[%s7 + $0x14] sm:$0xf]
    %v1454 = vld [vmem:[%s7 + $0x18] sm:$0xf]
    %v1455 = vld [vmem:[%s7 + $0x1c] sm:$0xf]
    %v1456 = vld [vmem:[%s7 + $0x20] sm:$0xf]
    %v1457 = vld [vmem:[%s7 + $0x24] sm:$0xf]
    %v1458 = vld [vmem:[%s7 + $0x28] sm:$0xf]
    %v1459 = vld [vmem:[%s7 + $0x2c] sm:$0xf]
    %v1460 = vld [vmem:[%s7 + $0x30] sm:$0xf]
    %v1461 = vld [vmem:[%s7 + $0x34] sm:$0xf]
    %v1462 = vld [vmem:[%s7 + $0x38] sm:$0xf]
    %v1463 = vld [vmem:[%s7 + $0x3c] sm:$0xf]
    %v1464 = vld [vmem:[%s8] sm:$0x1]
    %v1466 = vperm.slane %v1464, 0
    %v1484 = vunpack.c.l.b16 %v1448
    %v1485 = vunpack.c.l.b16 %v1449
    %v1486 = vunpack.c.l.b16 %v1450
    %v1487 = vunpack.c.l.b16 %v1451
    %v1488 = vunpack.c.l.b16 %v1452
    %v1489 = vunpack.c.l.b16 %v1453
    %v1490 = vunpack.c.l.b16 %v1454
    %v1491 = vunpack.c.l.b16 %v1455
    %v1492 = vunpack.c.l.b16 %v1456
    %v1493 = vunpack.c.l.b16 %v1457
    %v1494 = vunpack.c.l.b16 %v1458
    %v1495 = vunpack.c.l.b16 %v1459
    %v1496 = vunpack.c.l.b16 %v1460
    %v1497 = vunpack.c.l.b16 %v1461
    %v1498 = vunpack.c.l.b16 %v1462
    %v1499 = vunpack.c.l.b16 %v1463
    %v1500 = vpack.c.b16 %v1485, %v1484
    %v1501 = vpack.c.b16 %v1487, %v1486
    %v1502 = vpack.c.b16 %v1489, %v1488
    %v1503 = vpack.c.b16 %v1491, %v1490
    %v1504 = vpack.c.b16 %v1493, %v1492
    %v1505 = vpack.c.b16 %v1495, %v1494
    %v1506 = vpack.c.b16 %v1497, %v1496
    %v1507 = vpack.c.b16 %v1499, %v1498
    %1516 = vmatpush.bf16.msra.mxu0 %v1507
    %1517 = vmatpush.bf16.msra.mxu0 %v1506
    %1518 = vmatpush.bf16.msra.mxu0 %v1505
    %1519 = vmatpush.bf16.msra.mxu0 %v1504
    %1520 = vmatpush.bf16.msra.mxu0 %v1503
    %1521 = vmatpush.bf16.msra.mxu0 %v1502
    %1522 = vmatpush.bf16.msra.mxu0 %v1501
    %1523 = vmatpush.bf16.msra.mxu0 %v1500
    %1524 = vmatmul.bf16.gmra.mxu0 %v1447
    %v1525 = vpop.f32.mrf.mxu0
    %v1526 = vadd.f32 %v1466, %v1525
    %v1527 = vpop.f32.mrf.mxu0
    %1528 = vdwg.mxu0
    %v1529 = vtanh.pop %v1526
    %1530 = vst.msk [vmem:[#allocation8] sm:$0xff] %vm273, %v1529
    // Predicated region
    $region46: #{tpu_custom_call.1} parent=1 // pred_check
      _
    $region47: #{tpu_custom_call.1} parent=1 // pred_check_branch
      %1532 = sbr.rel (0) target = $region49
    $region48: #{tpu_custom_call.1} parent=1 // pred_region
      %1534 = vsyncadd [#allocation4], 0
      %s1535 = sshll.u32 [#allocation7], 4
      %s1536 = int_to_ptr.vmem [resolvable:$true] %s1535
      %s1537 = sshll.u32 %s9, 4
      %s1538 = int_to_ptr.hbm [resolvable:$true] %s1537
      %1543 = dma.vmem_to_hbm [thread:$0]  %s1536, 1024, %s1538, [#allocation4], 128, 128, 8
    $region49: #{tpu_custom_call.1} parent=1 // pred_fallthru
      _
    // Predicated region
    $region50: #{tpu_custom_call.1} parent=1 // pred_check
      _
    $region51: #{tpu_custom_call.1} parent=1 // pred_check_branch
      %1545 = sbr.rel (0) target = $region53
    $region52: #{tpu_custom_call.1} parent=1 // pred_region
      %1547 = vsyncadd [#allocation9], 0
      %s1549 = sshll.u32 [#allocation8], 4
      %s1550 = int_to_ptr.vmem [resolvable:$true] %s1549
      %s1551 = sshll.u32 %s10, 4
      %s1552 = int_to_ptr.hbm [resolvable:$true] %s1551
      %1554 = dma.vmem_to_hbm [thread:$0]  %s1550, 128, %s1552, [#allocation9]
    $region53: #{tpu_custom_call.1} parent=1 // pred_fallthru
      _
    // Predicated region
    $region54: #{tpu_custom_call.1} parent=1 // pred_check
      _
    $region55: #{tpu_custom_call.1} parent=1 // pred_check_branch
      %1556 = sbr.rel (0) target = $region57
    $region56: #{tpu_custom_call.1} parent=1 // pred_region
      %1558 = dma.done [#allocation4], 1024
    $region57: #{tpu_custom_call.1} parent=1 // pred_fallthru
      _
    // Predicated region
    $region58: #{tpu_custom_call.1} parent=1 // pred_check
      _
    $region59: #{tpu_custom_call.1} parent=1 // pred_check_branch
      %1560 = sbr.rel (0) target = $region61
    $region60: #{tpu_custom_call.1} parent=1 // pred_region
      %1562 = dma.done [#allocation9], 128
    $region61: #{tpu_custom_call.1} parent=1 // pred_fallthru
      _
    %1563 = vsyncpa [#allocation3], 1
    %1564 = vsyncpa [#allocation6], 1
    %1565 = vsyncpa [#allocation4], 1
    %1566 = vsyncpa [#allocation9], 1

</llo_original>
